<compile_context>
chip_gen: v7x
topology: tpu7x:2x2x1
jax: 0.10.0
libtpu: 0.0.40
codegen_flags: <defaults>
</compile_context>

<pallas_src>
import math

import jax
import jax.numpy as jnp
from jax.experimental import pallas as pl
from jax.experimental.pallas import tpu as pltpu

# ---------------- model hyper-parameters (small, consistent with module) ----
EMBED_DIM = 32                    # C
NUM_HEADS = 4
HEAD_DIM = EMBED_DIM // NUM_HEADS
SEQ_LEN = 8                       # L
BATCH = 2                         # N
TOKENS = BATCH * SEQ_LEN          # N*L rows handled in one invocation

_LOG2_SEQ = SEQ_LEN.bit_length() - 1
assert (1 << _LOG2_SEQ) == SEQ_LEN, "SEQ_LEN must be a power of two"
_NEG_INF = -1e30


# --------------------------- Pallas kernel ---------------------------------
def _mha_kernel(x_ref, wqkv_ref, bqkv_ref, wo_ref, bo_ref, o_ref):
    """Single invocation over the whole (N*L, E) token slab.

    x_ref    : (N*L, E)       tokens for all batch elements
    wqkv_ref : (3, H, E, Dh)  per-head Q/K/V weights ("x @ W" form);
                              Q weights pre-scaled by 1/sqrt(Dh)
    bqkv_ref : (3, H, 1, Dh)  per-head Q/K/V biases (Q bias pre-scaled)
    wo_ref   : (H, Dh, E)     per-head output-projection weights
    bo_ref   : (1, E)         output-projection bias
    o_ref    : (N*L, E)       output tokens
    """
    x = x_ref[...]                                                 # (NL, E)

    # Block-diagonal additive mask: a token only attends within its own batch
    # element (built once, reused by every head). Shift instead of divide.
    row = jax.lax.broadcasted_iota(jnp.int32, (TOKENS, TOKENS), 0)
    col = jax.lax.broadcasted_iota(jnp.int32, (TOKENS, TOKENS), 1)
    same_batch = (row >> _LOG2_SEQ) == (col >> _LOG2_SEQ)
    bias = jnp.where(same_batch, 0.0, _NEG_INF).astype(jnp.float32)

    acc = jnp.zeros((TOKENS, EMBED_DIM), jnp.float32)
    for h in range(NUM_HEADS):                      # static unroll over heads
        # Per-head projections: weight selected on its leading axis (free),
        # no lane slicing of activations. Scale already folded into Q.
        qh = jnp.dot(x, wqkv_ref[0, h],
                     preferred_element_type=jnp.float32) + bqkv_ref[0, h]
        kh = jnp.dot(x, wqkv_ref[1, h],
                     preferred_element_type=jnp.float32) + bqkv_ref[1, h]
        vh = jnp.dot(x, wqkv_ref[2, h],
                     preferred_element_type=jnp.float32) + bqkv_ref[2, h]

        # Scores over the whole slab, masked to block-diagonal.   (NL, NL)
        s = jax.lax.dot_general(qh, kh, (((1,), (1,)), ((), ())),
                                preferred_element_type=jnp.float32) + bias
        s = s - jnp.max(s, axis=-1, keepdims=True)
        p = jnp.exp(s)
        inv = pl.reciprocal(jnp.sum(p, axis=-1, keepdims=True), approx=True)

        oh = jnp.dot(p, vh, preferred_element_type=jnp.float32) * inv  # (NL, Dh)
        # Accumulated per-head output projection (replaces concatenate + dot).
        acc = acc + jnp.dot(oh, wo_ref[h], preferred_element_type=jnp.float32)

    o_ref[...] = (acc + bo_ref[...]).astype(o_ref.dtype)


# --------------------------- wrapper ----------------------------------------
def _prep_params(params):
    """Pack PyTorch-layout weights into 4 per-head arrays for the kernel."""
    scale = 1.0 / math.sqrt(HEAD_DIM)

    def per_head_w(w):   # (E, E) torch (out,in) -> (H, E, Dh) for "x @ W" form
        return jnp.transpose(w.reshape(NUM_HEADS, HEAD_DIM, EMBED_DIM),
                             (0, 2, 1))

    def per_head_b(b):   # (E,) -> (H, 1, Dh)
        return b.reshape(NUM_HEADS, 1, HEAD_DIM)

    wqkv = jnp.stack([per_head_w(params["wq"]) * scale,   # scale folded in
                      per_head_w(params["wk"]),
                      per_head_w(params["wv"])], axis=0)   # (3, H, E, Dh)
    bqkv = jnp.stack([per_head_b(params["bq"]) * scale,
                      per_head_b(params["bk"]),
                      per_head_b(params["bv"])], axis=0)   # (3, H, 1, Dh)
    wo = params["wo"].T.reshape(NUM_HEADS, HEAD_DIM, EMBED_DIM)  # (H, Dh, E)
    bo = params["bo"].reshape(1, EMBED_DIM)                       # (1, E)
    return wqkv, bqkv, wo, bo


@jax.jit
def self_attention(x_ncl, params):
    """x_ncl: (N, C, L) float32, matches the PyTorch module's input layout."""
    N, E, L = x_ncl.shape
    assert N == BATCH and E == EMBED_DIM and L == SEQ_LEN

    # (N, C, L) -> (N, L, E) -> (N*L, E) token slab for the kernel.
    x2d = jnp.transpose(x_ncl, (0, 2, 1)).reshape(N * L, E)
    wqkv, bqkv, wo, bo = _prep_params(params)

    vmem = pl.BlockSpec(memory_space=pltpu.MemorySpace.VMEM)
    out2d = pl.pallas_call(
        _mha_kernel,
        out_shape=jax.ShapeDtypeStruct((N * L, E), jnp.float32),
        in_specs=[vmem] * 5,
        out_specs=vmem,
    )(x2d, wqkv, bqkv, wo, bo)

    # (N*L, E) -> (N, L, E) -> (N, C, L)  == output.permute(1, 2, 0) in torch.
    return jnp.transpose(out2d.reshape(N, L, E), (0, 2, 1))


def init_params(key):
    """Deterministic synthetic init; shapes match nn.MultiheadAttention."""
    k = jax.random.split(key, 8)
    bound = 1.0 / math.sqrt(EMBED_DIM)
    u = lambda kk, shape: jax.random.uniform(kk, shape, jnp.float32,
                                             -bound, bound)
    return {
        # in_proj_weight (3E, E) split into q/k/v rows, each (E, E)
        "wq": u(k[0], (EMBED_DIM, EMBED_DIM)),
        "wk": u(k[1], (EMBED_DIM, EMBED_DIM)),
        "wv": u(k[2], (EMBED_DIM, EMBED_DIM)),
        "bq": u(k[3], (EMBED_DIM,)),
        "bk": u(k[4], (EMBED_DIM,)),
        "bv": u(k[5], (EMBED_DIM,)),
        # out_proj: Linear(E, E)
        "wo": u(k[6], (EMBED_DIM, EMBED_DIM)),
        "bo": u(k[7], (EMBED_DIM,)),
    }


# --------------------------- pure-JAX reference ------------------------------
def _reference(x_ncl, params):
    x = jnp.transpose(x_ncl, (2, 0, 1))        # (L, N, E)
    q = x @ params["wq"].T + params["bq"]
    k = x @ params["wk"].T + params["bk"]
    v = x @ params["wv"].T + params["bv"]
    L, N, E = x.shape

    def split(t):   # (L, N, E) -> (N, H, L, Dh)
        return jnp.transpose(t.reshape(L, N, NUM_HEADS, HEAD_DIM), (1, 2, 0, 3))

    qh, kh, vh = split(q), split(k), split(v)
    s = jnp.einsum("nhld,nhmd->nhlm", qh, kh) / math.sqrt(HEAD_DIM)
    p = jax.nn.softmax(s, axis=-1)
    o = jnp.einsum("nhlm,nhmd->nhld", p, vh)   # (N, H, L, Dh)
    o = jnp.transpose(o, (2, 0, 1, 3)).reshape(L, N, E)
    o = o @ params["wo"].T + params["bo"]      # (L, N, E)
    return jnp.transpose(o, (1, 2, 0))         # (N, E, L)


if __name__ == "__main__":
    key = jax.random.PRNGKey(0)
    pkey, xkey = jax.random.split(key)
    params = init_params(pkey)
    x = jax.random.normal(xkey, (BATCH, EMBED_DIM, SEQ_LEN), jnp.float32)

    out = self_attention(x, params)
    out = jax.block_until_ready(out)

    ref = _reference(x, params)
    assert out.shape == (BATCH, EMBED_DIM, SEQ_LEN)
    # Tolerance relaxed slightly vs 1e-4 to accommodate the EUP approximate
    # reciprocal used for the softmax normalisation.
    assert jnp.allclose(out, ref, atol=2e-3, rtol=2e-3), "mismatch vs reference"

    print("KERNEL_OK")
</pallas_src>

<mosaic_0001>
module attributes {stable_mosaic.version = 11 : i64} {
  func.func @_mha_kernel(%arg0: memref<16x32xf32, #tpu.memory_space<vmem>>, %arg1: memref<3x4x32x8xf32, #tpu.memory_space<vmem>>, %arg2: memref<3x4x1x8xf32, #tpu.memory_space<vmem>>, %arg3: memref<4x8x32xf32, #tpu.memory_space<vmem>>, %arg4: memref<1x32xf32, #tpu.memory_space<vmem>>, %arg5: memref<16x32xf32, #tpu.memory_space<vmem>>) attributes {dimension_semantics = [], scalar_prefetch = 0 : i64, scratch_operands = 0 : i64, tpu.core_type = #tpu.core_type<tc>} {
    %c0 = arith.constant 0 : index
    %c0_0 = arith.constant 0 : index
    %0 = vector.load %arg0[%c0, %c0_0] : memref<16x32xf32, #tpu.memory_space<vmem>>, vector<16x32xf32>
    %1 = tpu.iota {dimensions = array<i32: 0>} : vector<16x16xi32>
    %2 = tpu.iota {dimensions = array<i32: 1>} : vector<16x16xi32>
    %c3_i32 = arith.constant 3 : i32
    %3 = vector.broadcast %c3_i32 : i32 to vector<16x16xi32>
    %4 = arith.shrsi %1, %3 : vector<16x16xi32>
    %c3_i32_1 = arith.constant 3 : i32
    %5 = vector.broadcast %c3_i32_1 : i32 to vector<16x16xi32>
    %6 = arith.shrsi %2, %5 : vector<16x16xi32>
    %7 = arith.cmpi eq, %4, %6 : vector<16x16xi32>
    %cst = arith.constant 0.000000e+00 : f32
    %cst_2 = arith.constant -1.000000e+30 : f32
    %8 = vector.broadcast %cst : f32 to vector<16x16xf32>
    %9 = vector.broadcast %cst_2 : f32 to vector<16x16xf32>
    %10 = arith.select %7, %8, %9 : vector<16x16xi1>, vector<16x16xf32>
    %cst_3 = arith.constant 0.000000e+00 : f32
    %11 = vector.broadcast %cst_3 : f32 to vector<16x32xf32>
    %c0_4 = arith.constant 0 : index
    %c0_5 = arith.constant 0 : index
    %c0_6 = arith.constant 0 : index
    %c0_7 = arith.constant 0 : index
    %12 = vector.load %arg1[%c0_4, %c0_5, %c0_6, %c0_7] : memref<3x4x32x8xf32, #tpu.memory_space<vmem>>, vector<1x1x32x8xf32>
    %13 = vector.shape_cast %12 : vector<1x1x32x8xf32> to vector<32x8xf32>
    %cst_8 = arith.constant dense<0.000000e+00> : vector<16x8xf32>
    %14 = tpu.matmul %0, %13, %cst_8 {dimension_numbers = #tpu.dot_dimension_numbers<[1], [0], [0], [1], [0, 0, 1, 1], [], []>} : vector<16x32xf32>, vector<32x8xf32>, vector<16x8xf32> -> vector<16x8xf32>
    %c0_9 = arith.constant 0 : index
    %c0_10 = arith.constant 0 : index
    %c0_11 = arith.constant 0 : index
    %c0_12 = arith.constant 0 : index
    %15 = vector.load %arg2[%c0_9, %c0_10, %c0_11, %c0_12] : memref<3x4x1x8xf32, #tpu.memory_space<vmem>>, vector<1x1x1x8xf32>
    %16 = vector.shape_cast %15 : vector<1x1x1x8xf32> to vector<1x8xf32>
    %17 = vector.broadcast %16 : vector<1x8xf32> to vector<16x8xf32>
    %18 = arith.addf %14, %17 : vector<16x8xf32>
    %c1 = arith.constant 1 : index
    %c0_13 = arith.constant 0 : index
    %c0_14 = arith.constant 0 : index
    %c0_15 = arith.constant 0 : index
    %19 = vector.load %arg1[%c1, %c0_13, %c0_14, %c0_15] : memref<3x4x32x8xf32, #tpu.memory_space<vmem>>, vector<1x1x32x8xf32>
    %20 = vector.shape_cast %19 : vector<1x1x32x8xf32> to vector<32x8xf32>
    %cst_16 = arith.constant dense<0.000000e+00> : vector<16x8xf32>
    %21 = tpu.matmul %0, %20, %cst_16 {dimension_numbers = #tpu.dot_dimension_numbers<[1], [0], [0], [1], [0, 0, 1, 1], [], []>} : vector<16x32xf32>, vector<32x8xf32>, vector<16x8xf32> -> vector<16x8xf32>
    %c1_17 = arith.constant 1 : index
    %c0_18 = arith.constant 0 : index
    %c0_19 = arith.constant 0 : index
    %c0_20 = arith.constant 0 : index
    %22 = vector.load %arg2[%c1_17, %c0_18, %c0_19, %c0_20] : memref<3x4x1x8xf32, #tpu.memory_space<vmem>>, vector<1x1x1x8xf32>
    %23 = vector.shape_cast %22 : vector<1x1x1x8xf32> to vector<1x8xf32>
    %24 = vector.broadcast %23 : vector<1x8xf32> to vector<16x8xf32>
    %25 = arith.addf %21, %24 : vector<16x8xf32>
    %c2 = arith.constant 2 : index
    %c0_21 = arith.constant 0 : index
    %c0_22 = arith.constant 0 : index
    %c0_23 = arith.constant 0 : index
    %26 = vector.load %arg1[%c2, %c0_21, %c0_22, %c0_23] : memref<3x4x32x8xf32, #tpu.memory_space<vmem>>, vector<1x1x32x8xf32>
    %27 = vector.shape_cast %26 : vector<1x1x32x8xf32> to vector<32x8xf32>
    %cst_24 = arith.constant dense<0.000000e+00> : vector<16x8xf32>
    %28 = tpu.matmul %0, %27, %cst_24 {dimension_numbers = #tpu.dot_dimension_numbers<[1], [0], [0], [1], [0, 0, 1, 1], [], []>} : vector<16x32xf32>, vector<32x8xf32>, vector<16x8xf32> -> vector<16x8xf32>
    %c2_25 = arith.constant 2 : index
    %c0_26 = arith.constant 0 : index
    %c0_27 = arith.constant 0 : index
    %c0_28 = arith.constant 0 : index
    %29 = vector.load %arg2[%c2_25, %c0_26, %c0_27, %c0_28] : memref<3x4x1x8xf32, #tpu.memory_space<vmem>>, vector<1x1x1x8xf32>
    %30 = vector.shape_cast %29 : vector<1x1x1x8xf32> to vector<1x8xf32>
    %31 = vector.broadcast %30 : vector<1x8xf32> to vector<16x8xf32>
    %32 = arith.addf %28, %31 : vector<16x8xf32>
    %cst_29 = arith.constant dense<0.000000e+00> : vector<16x16xf32>
    %33 = tpu.matmul %18, %25, %cst_29 {dimension_numbers = #tpu.dot_dimension_numbers<[1], [1], [0], [0], [0, 0, 1, 0], [], []>} : vector<16x8xf32>, vector<16x8xf32>, vector<16x16xf32> -> vector<16x16xf32>
    %34 = arith.addf %33, %10 : vector<16x16xf32>
    %cst_30 = arith.constant dense<0xFF800000> : vector<16xf32>
    %35 = vector.multi_reduction <maximumf>, %34, %cst_30 [1] : vector<16x16xf32> to vector<16xf32>
    %36 = vector.shape_cast %35 : vector<16xf32> to vector<16x1xf32>
    %37 = vector.broadcast %36 : vector<16x1xf32> to vector<16x16xf32>
    %38 = arith.subf %34, %37 : vector<16x16xf32>
    %39 = math.exp %38 : vector<16x16xf32>
    %cst_31 = arith.constant dense<0.000000e+00> : vector<16xf32>
    %40 = vector.multi_reduction <add>, %39, %cst_31 [1] : vector<16x16xf32> to vector<16xf32>
    %41 = vector.shape_cast %40 : vector<16xf32> to vector<16x1xf32>
    %42 = tpu.reciprocal %41 {approx = true} : vector<16x1xf32> -> vector<16x1xf32>
    %cst_32 = arith.constant dense<0.000000e+00> : vector<16x8xf32>
    %43 = tpu.matmul %39, %32, %cst_32 {dimension_numbers = #tpu.dot_dimension_numbers<[1], [0], [0], [1], [0, 0, 1, 1], [], []>} : vector<16x16xf32>, vector<16x8xf32>, vector<16x8xf32> -> vector<16x8xf32>
    %44 = vector.broadcast %42 : vector<16x1xf32> to vector<16x8xf32>
    %45 = arith.mulf %43, %44 : vector<16x8xf32>
    %c0_33 = arith.constant 0 : index
    %c0_34 = arith.constant 0 : index
    %c0_35 = arith.constant 0 : index
    %46 = vector.load %arg3[%c0_33, %c0_34, %c0_35] : memref<4x8x32xf32, #tpu.memory_space<vmem>>, vector<1x8x32xf32>
    %47 = vector.shape_cast %46 : vector<1x8x32xf32> to vector<8x32xf32>
    %cst_36 = arith.constant dense<0.000000e+00> : vector<16x32xf32>
    %48 = tpu.matmul %45, %47, %cst_36 {dimension_numbers = #tpu.dot_dimension_numbers<[1], [0], [0], [1], [0, 0, 1, 1], [], []>} : vector<16x8xf32>, vector<8x32xf32>, vector<16x32xf32> -> vector<16x32xf32>
    %49 = arith.addf %11, %48 : vector<16x32xf32>
    %c0_37 = arith.constant 0 : index
    %c1_38 = arith.constant 1 : index
    %c0_39 = arith.constant 0 : index
    %c0_40 = arith.constant 0 : index
    %50 = vector.load %arg1[%c0_37, %c1_38, %c0_39, %c0_40] : memref<3x4x32x8xf32, #tpu.memory_space<vmem>>, vector<1x1x32x8xf32>
    %51 = vector.shape_cast %50 : vector<1x1x32x8xf32> to vector<32x8xf32>
    %cst_41 = arith.constant dense<0.000000e+00> : vector<16x8xf32>
    %52 = tpu.matmul %0, %51, %cst_41 {dimension_numbers = #tpu.dot_dimension_numbers<[1], [0], [0], [1], [0, 0, 1, 1], [], []>} : vector<16x32xf32>, vector<32x8xf32>, vector<16x8xf32> -> vector<16x8xf32>
    %c0_42 = arith.constant 0 : index
    %c1_43 = arith.constant 1 : index
    %c0_44 = arith.constant 0 : index
    %c0_45 = arith.constant 0 : index
    %53 = vector.load %arg2[%c0_42, %c1_43, %c0_44, %c0_45] : memref<3x4x1x8xf32, #tpu.memory_space<vmem>>, vector<1x1x1x8xf32>
    %54 = vector.shape_cast %53 : vector<1x1x1x8xf32> to vector<1x8xf32>
    %55 = vector.broadcast %54 : vector<1x8xf32> to vector<16x8xf32>
    %56 = arith.addf %52, %55 : vector<16x8xf32>
    %c1_46 = arith.constant 1 : index
    %c1_47 = arith.constant 1 : index
    %c0_48 = arith.constant 0 : index
    %c0_49 = arith.constant 0 : index
    %57 = vector.load %arg1[%c1_46, %c1_47, %c0_48, %c0_49] : memref<3x4x32x8xf32, #tpu.memory_space<vmem>>, vector<1x1x32x8xf32>
    %58 = vector.shape_cast %57 : vector<1x1x32x8xf32> to vector<32x8xf32>
    %cst_50 = arith.constant dense<0.000000e+00> : vector<16x8xf32>
    %59 = tpu.matmul %0, %58, %cst_50 {dimension_numbers = #tpu.dot_dimension_numbers<[1], [0], [0], [1], [0, 0, 1, 1], [], []>} : vector<16x32xf32>, vector<32x8xf32>, vector<16x8xf32> -> vector<16x8xf32>
    %c1_51 = arith.constant 1 : index
    %c1_52 = arith.constant 1 : index
    %c0_53 = arith.constant 0 : index
    %c0_54 = arith.constant 0 : index
    %60 = vector.load %arg2[%c1_51, %c1_52, %c0_53, %c0_54] : memref<3x4x1x8xf32, #tpu.memory_space<vmem>>, vector<1x1x1x8xf32>
    %61 = vector.shape_cast %60 : vector<1x1x1x8xf32> to vector<1x8xf32>
    %62 = vector.broadcast %61 : vector<1x8xf32> to vector<16x8xf32>
    %63 = arith.addf %59, %62 : vector<16x8xf32>
    %c2_55 = arith.constant 2 : index
    %c1_56 = arith.constant 1 : index
    %c0_57 = arith.constant 0 : index
    %c0_58 = arith.constant 0 : index
    %64 = vector.load %arg1[%c2_55, %c1_56, %c0_57, %c0_58] : memref<3x4x32x8xf32, #tpu.memory_space<vmem>>, vector<1x1x32x8xf32>
    %65 = vector.shape_cast %64 : vector<1x1x32x8xf32> to vector<32x8xf32>
    %cst_59 = arith.constant dense<0.000000e+00> : vector<16x8xf32>
    %66 = tpu.matmul %0, %65, %cst_59 {dimension_numbers = #tpu.dot_dimension_numbers<[1], [0], [0], [1], [0, 0, 1, 1], [], []>} : vector<16x32xf32>, vector<32x8xf32>, vector<16x8xf32> -> vector<16x8xf32>
    %c2_60 = arith.constant 2 : index
    %c1_61 = arith.constant 1 : index
    %c0_62 = arith.constant 0 : index
    %c0_63 = arith.constant 0 : index
    %67 = vector.load %arg2[%c2_60, %c1_61, %c0_62, %c0_63] : memref<3x4x1x8xf32, #tpu.memory_space<vmem>>, vector<1x1x1x8xf32>
    %68 = vector.shape_cast %67 : vector<1x1x1x8xf32> to vector<1x8xf32>
    %69 = vector.broadcast %68 : vector<1x8xf32> to vector<16x8xf32>
    %70 = arith.addf %66, %69 : vector<16x8xf32>
    %cst_64 = arith.constant dense<0.000000e+00> : vector<16x16xf32>
    %71 = tpu.matmul %56, %63, %cst_64 {dimension_numbers = #tpu.dot_dimension_numbers<[1], [1], [0], [0], [0, 0, 1, 0], [], []>} : vector<16x8xf32>, vector<16x8xf32>, vector<16x16xf32> -> vector<16x16xf32>
    %72 = arith.addf %71, %10 : vector<16x16xf32>
    %cst_65 = arith.constant dense<0xFF800000> : vector<16xf32>
    %73 = vector.multi_reduction <maximumf>, %72, %cst_65 [1] : vector<16x16xf32> to vector<16xf32>
    %74 = vector.shape_cast %73 : vector<16xf32> to vector<16x1xf32>
    %75 = vector.broadcast %74 : vector<16x1xf32> to vector<16x16xf32>
    %76 = arith.subf %72, %75 : vector<16x16xf32>
    %77 = math.exp %76 : vector<16x16xf32>
    %cst_66 = arith.constant dense<0.000000e+00> : vector<16xf32>
    %78 = vector.multi_reduction <add>, %77, %cst_66 [1] : vector<16x16xf32> to vector<16xf32>
    %79 = vector.shape_cast %78 : vector<16xf32> to vector<16x1xf32>
    %80 = tpu.reciprocal %79 {approx = true} : vector<16x1xf32> -> vector<16x1xf32>
    %cst_67 = arith.constant dense<0.000000e+00> : vector<16x8xf32>
    %81 = tpu.matmul %77, %70, %cst_67 {dimension_numbers = #tpu.dot_dimension_numbers<[1], [0], [0], [1], [0, 0, 1, 1], [], []>} : vector<16x16xf32>, vector<16x8xf32>, vector<16x8xf32> -> vector<16x8xf32>
    %82 = vector.broadcast %80 : vector<16x1xf32> to vector<16x8xf32>
    %83 = arith.mulf %81, %82 : vector<16x8xf32>
    %c1_68 = arith.constant 1 : index
    %c0_69 = arith.constant 0 : index
    %c0_70 = arith.constant 0 : index
    %84 = vector.load %arg3[%c1_68, %c0_69, %c0_70] : memref<4x8x32xf32, #tpu.memory_space<vmem>>, vector<1x8x32xf32>
    %85 = vector.shape_cast %84 : vector<1x8x32xf32> to vector<8x32xf32>
    %cst_71 = arith.constant dense<0.000000e+00> : vector<16x32xf32>
    %86 = tpu.matmul %83, %85, %cst_71 {dimension_numbers = #tpu.dot_dimension_numbers<[1], [0], [0], [1], [0, 0, 1, 1], [], []>} : vector<16x8xf32>, vector<8x32xf32>, vector<16x32xf32> -> vector<16x32xf32>
    %87 = arith.addf %49, %86 : vector<16x32xf32>
    %c0_72 = arith.constant 0 : index
    %c2_73 = arith.constant 2 : index
    %c0_74 = arith.constant 0 : index
    %c0_75 = arith.constant 0 : index
    %88 = vector.load %arg1[%c0_72, %c2_73, %c0_74, %c0_75] : memref<3x4x32x8xf32, #tpu.memory_space<vmem>>, vector<1x1x32x8xf32>
    %89 = vector.shape_cast %88 : vector<1x1x32x8xf32> to vector<32x8xf32>
    %cst_76 = arith.constant dense<0.000000e+00> : vector<16x8xf32>
    %90 = tpu.matmul %0, %89, %cst_76 {dimension_numbers = #tpu.dot_dimension_numbers<[1], [0], [0], [1], [0, 0, 1, 1], [], []>} : vector<16x32xf32>, vector<32x8xf32>, vector<16x8xf32> -> vector<16x8xf32>
    %c0_77 = arith.constant 0 : index
    %c2_78 = arith.constant 2 : index
    %c0_79 = arith.constant 0 : index
    %c0_80 = arith.constant 0 : index
    %91 = vector.load %arg2[%c0_77, %c2_78, %c0_79, %c0_80] : memref<3x4x1x8xf32, #tpu.memory_space<vmem>>, vector<1x1x1x8xf32>
    %92 = vector.shape_cast %91 : vector<1x1x1x8xf32> to vector<1x8xf32>
    %93 = vector.broadcast %92 : vector<1x8xf32> to vector<16x8xf32>
    %94 = arith.addf %90, %93 : vector<16x8xf32>
    %c1_81 = arith.constant 1 : index
    %c2_82 = arith.constant 2 : index
    %c0_83 = arith.constant 0 : index
    %c0_84 = arith.constant 0 : index
    %95 = vector.load %arg1[%c1_81, %c2_82, %c0_83, %c0_84] : memref<3x4x32x8xf32, #tpu.memory_space<vmem>>, vector<1x1x32x8xf32>
    %96 = vector.shape_cast %95 : vector<1x1x32x8xf32> to vector<32x8xf32>
    %cst_85 = arith.constant dense<0.000000e+00> : vector<16x8xf32>
    %97 = tpu.matmul %0, %96, %cst_85 {dimension_numbers = #tpu.dot_dimension_numbers<[1], [0], [0], [1], [0, 0, 1, 1], [], []>} : vector<16x32xf32>, vector<32x8xf32>, vector<16x8xf32> -> vector<16x8xf32>
    %c1_86 = arith.constant 1 : index
    %c2_87 = arith.constant 2 : index
    %c0_88 = arith.constant 0 : index
    %c0_89 = arith.constant 0 : index
    %98 = vector.load %arg2[%c1_86, %c2_87, %c0_88, %c0_89] : memref<3x4x1x8xf32, #tpu.memory_space<vmem>>, vector<1x1x1x8xf32>
    %99 = vector.shape_cast %98 : vector<1x1x1x8xf32> to vector<1x8xf32>
    %100 = vector.broadcast %99 : vector<1x8xf32> to vector<16x8xf32>
    %101 = arith.addf %97, %100 : vector<16x8xf32>
    %c2_90 = arith.constant 2 : index
    %c2_91 = arith.constant 2 : index
    %c0_92 = arith.constant 0 : index
    %c0_93 = arith.constant 0 : index
    %102 = vector.load %arg1[%c2_90, %c2_91, %c0_92, %c0_93] : memref<3x4x32x8xf32, #tpu.memory_space<vmem>>, vector<1x1x32x8xf32>
    %103 = vector.shape_cast %102 : vector<1x1x32x8xf32> to vector<32x8xf32>
    %cst_94 = arith.constant dense<0.000000e+00> : vector<16x8xf32>
    %104 = tpu.matmul %0, %103, %cst_94 {dimension_numbers = #tpu.dot_dimension_numbers<[1], [0], [0], [1], [0, 0, 1, 1], [], []>} : vector<16x32xf32>, vector<32x8xf32>, vector<16x8xf32> -> vector<16x8xf32>
    %c2_95 = arith.constant 2 : index
    %c2_96 = arith.constant 2 : index
    %c0_97 = arith.constant 0 : index
    %c0_98 = arith.constant 0 : index
    %105 = vector.load %arg2[%c2_95, %c2_96, %c0_97, %c0_98] : memref<3x4x1x8xf32, #tpu.memory_space<vmem>>, vector<1x1x1x8xf32>
    %106 = vector.shape_cast %105 : vector<1x1x1x8xf32> to vector<1x8xf32>
    %107 = vector.broadcast %106 : vector<1x8xf32> to vector<16x8xf32>
    %108 = arith.addf %104, %107 : vector<16x8xf32>
    %cst_99 = arith.constant dense<0.000000e+00> : vector<16x16xf32>
    %109 = tpu.matmul %94, %101, %cst_99 {dimension_numbers = #tpu.dot_dimension_numbers<[1], [1], [0], [0], [0, 0, 1, 0], [], []>} : vector<16x8xf32>, vector<16x8xf32>, vector<16x16xf32> -> vector<16x16xf32>
    %110 = arith.addf %109, %10 : vector<16x16xf32>
    %cst_100 = arith.constant dense<0xFF800000> : vector<16xf32>
    %111 = vector.multi_reduction <maximumf>, %110, %cst_100 [1] : vector<16x16xf32> to vector<16xf32>
    %112 = vector.shape_cast %111 : vector<16xf32> to vector<16x1xf32>
    %113 = vector.broadcast %112 : vector<16x1xf32> to vector<16x16xf32>
    %114 = arith.subf %110, %113 : vector<16x16xf32>
    %115 = math.exp %114 : vector<16x16xf32>
    %cst_101 = arith.constant dense<0.000000e+00> : vector<16xf32>
    %116 = vector.multi_reduction <add>, %115, %cst_101 [1] : vector<16x16xf32> to vector<16xf32>
    %117 = vector.shape_cast %116 : vector<16xf32> to vector<16x1xf32>
    %118 = tpu.reciprocal %117 {approx = true} : vector<16x1xf32> -> vector<16x1xf32>
    %cst_102 = arith.constant dense<0.000000e+00> : vector<16x8xf32>
    %119 = tpu.matmul %115, %108, %cst_102 {dimension_numbers = #tpu.dot_dimension_numbers<[1], [0], [0], [1], [0, 0, 1, 1], [], []>} : vector<16x16xf32>, vector<16x8xf32>, vector<16x8xf32> -> vector<16x8xf32>
    %120 = vector.broadcast %118 : vector<16x1xf32> to vector<16x8xf32>
    %121 = arith.mulf %119, %120 : vector<16x8xf32>
    %c2_103 = arith.constant 2 : index
    %c0_104 = arith.constant 0 : index
    %c0_105 = arith.constant 0 : index
    %122 = vector.load %arg3[%c2_103, %c0_104, %c0_105] : memref<4x8x32xf32, #tpu.memory_space<vmem>>, vector<1x8x32xf32>
    %123 = vector.shape_cast %122 : vector<1x8x32xf32> to vector<8x32xf32>
    %cst_106 = arith.constant dense<0.000000e+00> : vector<16x32xf32>
    %124 = tpu.matmul %121, %123, %cst_106 {dimension_numbers = #tpu.dot_dimension_numbers<[1], [0], [0], [1], [0, 0, 1, 1], [], []>} : vector<16x8xf32>, vector<8x32xf32>, vector<16x32xf32> -> vector<16x32xf32>
    %125 = arith.addf %87, %124 : vector<16x32xf32>
    %c0_107 = arith.constant 0 : index
    %c3 = arith.constant 3 : index
    %c0_108 = arith.constant 0 : index
    %c0_109 = arith.constant 0 : index
    %126 = vector.load %arg1[%c0_107, %c3, %c0_108, %c0_109] : memref<3x4x32x8xf32, #tpu.memory_space<vmem>>, vector<1x1x32x8xf32>
    %127 = vector.shape_cast %126 : vector<1x1x32x8xf32> to vector<32x8xf32>
    %cst_110 = arith.constant dense<0.000000e+00> : vector<16x8xf32>
    %128 = tpu.matmul %0, %127, %cst_110 {dimension_numbers = #tpu.dot_dimension_numbers<[1], [0], [0], [1], [0, 0, 1, 1], [], []>} : vector<16x32xf32>, vector<32x8xf32>, vector<16x8xf32> -> vector<16x8xf32>
    %c0_111 = arith.constant 0 : index
    %c3_112 = arith.constant 3 : index
    %c0_113 = arith.constant 0 : index
    %c0_114 = arith.constant 0 : index
    %129 = vector.load %arg2[%c0_111, %c3_112, %c0_113, %c0_114] : memref<3x4x1x8xf32, #tpu.memory_space<vmem>>, vector<1x1x1x8xf32>
    %130 = vector.shape_cast %129 : vector<1x1x1x8xf32> to vector<1x8xf32>
    %131 = vector.broadcast %130 : vector<1x8xf32> to vector<16x8xf32>
    %132 = arith.addf %128, %131 : vector<16x8xf32>
    %c1_115 = arith.constant 1 : index
    %c3_116 = arith.constant 3 : index
    %c0_117 = arith.constant 0 : index
    %c0_118 = arith.constant 0 : index
    %133 = vector.load %arg1[%c1_115, %c3_116, %c0_117, %c0_118] : memref<3x4x32x8xf32, #tpu.memory_space<vmem>>, vector<1x1x32x8xf32>
    %134 = vector.shape_cast %133 : vector<1x1x32x8xf32> to vector<32x8xf32>
    %cst_119 = arith.constant dense<0.000000e+00> : vector<16x8xf32>
    %135 = tpu.matmul %0, %134, %cst_119 {dimension_numbers = #tpu.dot_dimension_numbers<[1], [0], [0], [1], [0, 0, 1, 1], [], []>} : vector<16x32xf32>, vector<32x8xf32>, vector<16x8xf32> -> vector<16x8xf32>
    %c1_120 = arith.constant 1 : index
    %c3_121 = arith.constant 3 : index
    %c0_122 = arith.constant 0 : index
    %c0_123 = arith.constant 0 : index
    %136 = vector.load %arg2[%c1_120, %c3_121, %c0_122, %c0_123] : memref<3x4x1x8xf32, #tpu.memory_space<vmem>>, vector<1x1x1x8xf32>
    %137 = vector.shape_cast %136 : vector<1x1x1x8xf32> to vector<1x8xf32>
    %138 = vector.broadcast %137 : vector<1x8xf32> to vector<16x8xf32>
    %139 = arith.addf %135, %138 : vector<16x8xf32>
    %c2_124 = arith.constant 2 : index
    %c3_125 = arith.constant 3 : index
    %c0_126 = arith.constant 0 : index
    %c0_127 = arith.constant 0 : index
    %140 = vector.load %arg1[%c2_124, %c3_125, %c0_126, %c0_127] : memref<3x4x32x8xf32, #tpu.memory_space<vmem>>, vector<1x1x32x8xf32>
    %141 = vector.shape_cast %140 : vector<1x1x32x8xf32> to vector<32x8xf32>
    %cst_128 = arith.constant dense<0.000000e+00> : vector<16x8xf32>
    %142 = tpu.matmul %0, %141, %cst_128 {dimension_numbers = #tpu.dot_dimension_numbers<[1], [0], [0], [1], [0, 0, 1, 1], [], []>} : vector<16x32xf32>, vector<32x8xf32>, vector<16x8xf32> -> vector<16x8xf32>
    %c2_129 = arith.constant 2 : index
    %c3_130 = arith.constant 3 : index
    %c0_131 = arith.constant 0 : index
    %c0_132 = arith.constant 0 : index
    %143 = vector.load %arg2[%c2_129, %c3_130, %c0_131, %c0_132] : memref<3x4x1x8xf32, #tpu.memory_space<vmem>>, vector<1x1x1x8xf32>
    %144 = vector.shape_cast %143 : vector<1x1x1x8xf32> to vector<1x8xf32>
    %145 = vector.broadcast %144 : vector<1x8xf32> to vector<16x8xf32>
    %146 = arith.addf %142, %145 : vector<16x8xf32>
    %cst_133 = arith.constant dense<0.000000e+00> : vector<16x16xf32>
    %147 = tpu.matmul %132, %139, %cst_133 {dimension_numbers = #tpu.dot_dimension_numbers<[1], [1], [0], [0], [0, 0, 1, 0], [], []>} : vector<16x8xf32>, vector<16x8xf32>, vector<16x16xf32> -> vector<16x16xf32>
    %148 = arith.addf %147, %10 : vector<16x16xf32>
    %cst_134 = arith.constant dense<0xFF800000> : vector<16xf32>
    %149 = vector.multi_reduction <maximumf>, %148, %cst_134 [1] : vector<16x16xf32> to vector<16xf32>
    %150 = vector.shape_cast %149 : vector<16xf32> to vector<16x1xf32>
    %151 = vector.broadcast %150 : vector<16x1xf32> to vector<16x16xf32>
    %152 = arith.subf %148, %151 : vector<16x16xf32>
    %153 = math.exp %152 : vector<16x16xf32>
    %cst_135 = arith.constant dense<0.000000e+00> : vector<16xf32>
    %154 = vector.multi_reduction <add>, %153, %cst_135 [1] : vector<16x16xf32> to vector<16xf32>
    %155 = vector.shape_cast %154 : vector<16xf32> to vector<16x1xf32>
    %156 = tpu.reciprocal %155 {approx = true} : vector<16x1xf32> -> vector<16x1xf32>
    %cst_136 = arith.constant dense<0.000000e+00> : vector<16x8xf32>
    %157 = tpu.matmul %153, %146, %cst_136 {dimension_numbers = #tpu.dot_dimension_numbers<[1], [0], [0], [1], [0, 0, 1, 1], [], []>} : vector<16x16xf32>, vector<16x8xf32>, vector<16x8xf32> -> vector<16x8xf32>
    %158 = vector.broadcast %156 : vector<16x1xf32> to vector<16x8xf32>
    %159 = arith.mulf %157, %158 : vector<16x8xf32>
    %c3_137 = arith.constant 3 : index
    %c0_138 = arith.constant 0 : index
    %c0_139 = arith.constant 0 : index
    %160 = vector.load %arg3[%c3_137, %c0_138, %c0_139] : memref<4x8x32xf32, #tpu.memory_space<vmem>>, vector<1x8x32xf32>
    %161 = vector.shape_cast %160 : vector<1x8x32xf32> to vector<8x32xf32>
    %cst_140 = arith.constant dense<0.000000e+00> : vector<16x32xf32>
    %162 = tpu.matmul %159, %161, %cst_140 {dimension_numbers = #tpu.dot_dimension_numbers<[1], [0], [0], [1], [0, 0, 1, 1], [], []>} : vector<16x8xf32>, vector<8x32xf32>, vector<16x32xf32> -> vector<16x32xf32>
    %163 = arith.addf %125, %162 : vector<16x32xf32>
    %c0_141 = arith.constant 0 : index
    %c0_142 = arith.constant 0 : index
    %164 = vector.load %arg4[%c0_141, %c0_142] : memref<1x32xf32, #tpu.memory_space<vmem>>, vector<1x32xf32>
    %165 = vector.broadcast %164 : vector<1x32xf32> to vector<16x32xf32>
    %166 = arith.addf %163, %165 : vector<16x32xf32>
    %c0_143 = arith.constant 0 : index
    %c0_144 = arith.constant 0 : index
    %167 = vector.load %arg5[%c0_143, %c0_144] : memref<16x32xf32, #tpu.memory_space<vmem>>, vector<16x32xf32>
    tpu.vector_store %arg5[%c0_143, %c0_144], %166 {strides = array<i32>} : memref<16x32xf32, #tpu.memory_space<vmem>>, vector<16x32xf32>,
    return
  }
}

</mosaic_0001>

<llo_original>
// kernel: self_attention.1
$region0: #{self_attention.1}
  #allocation0 [shape = 'u32[]', space=smem, size = 0x4, offset = 0x4, fixed_abs, tag = 'smem constant byte address 0x4 - core index']
  #allocation1 [shape = 'u32[144,128]{1,0:T(1,128)}', space=vmem, size = 0x12000, scoped, tag = 'internal scratch']
  %s0 = inlined_call_operand.vmem [shape: f32[16,32], index: 0, kind: input, shape index: {}]
  %s1 = inlined_call_operand.vmem [shape: f32[3,4,32,8], index: 1, kind: input, shape index: {}]
  %s2 = inlined_call_operand.vmem [shape: f32[3,4,1,8], index: 2, kind: input, shape index: {}]
  %s3 = inlined_call_operand.vmem [shape: f32[4,8,32], index: 3, kind: input, shape index: {}]
  %s4 = inlined_call_operand.vmem [shape: f32[1,32], index: 4, kind: input, shape index: {}]
  %s5 = inlined_call_operand.hbm [shape: f32[16,32], index: 5, kind: output, shape index: {}]
  %s6 = sld [smem:[#allocation0]]
  $region30: #{self_attention.1} parent=0
    _
  %s8 = ssub.s32 1, %s6
  %s9 = scalar_select 0, %s8, %s6
  $region1: #{self_attention.1} parent=0
    #allocation2 [shape = 'u8[8192]{0}', space=vmem, size = 0x2000, scoped, tag = 'output window, operand 0, single buffered']
    #allocation3 [shape = 's32[1]{0}', space=sflag, size = 0x4, scoped, tag = 'scoped memory for self_attention.1']
    %10 = vsyncpa [#allocation3], 0
    // Predicated region
    $region2: #{self_attention.1} parent=1 // pred_check
      _
    $region3: #{self_attention.1} parent=1 // pred_check_branch
      %12 = sbr.rel (0) target = $region5
    $region4: #{self_attention.1} parent=1 // pred_region
      _
    $region5: #{self_attention.1} parent=1 // pred_fallthru
      _
    // Predicated region
    $region6: #{self_attention.1} parent=1 // pred_check
      _
    $region7: #{self_attention.1} parent=1 // pred_check_branch
      %14 = sbr.rel (0) target = $region9
    $region8: #{self_attention.1} parent=1 // pred_region
      _
    $region9: #{self_attention.1} parent=1 // pred_fallthru
      _
    // Predicated region
    $region10: #{self_attention.1} parent=1 // pred_check
      _
    $region11: #{self_attention.1} parent=1 // pred_check_branch
      %16 = sbr.rel (0) target = $region13
    $region12: #{self_attention.1} parent=1 // pred_region
      _
    $region13: #{self_attention.1} parent=1 // pred_fallthru
      _
    // Predicated region
    $region14: #{self_attention.1} parent=1 // pred_check
      _
    $region15: #{self_attention.1} parent=1 // pred_check_branch
      %18 = sbr.rel (0) target = $region17
    $region16: #{self_attention.1} parent=1 // pred_region
      _
    $region17: #{self_attention.1} parent=1 // pred_fallthru
      _
    // Predicated region
    $region18: #{self_attention.1} parent=1 // pred_check
      _
    $region19: #{self_attention.1} parent=1 // pred_check_branch
      %20 = sbr.rel (0) target = $region21
    $region20: #{self_attention.1} parent=1 // pred_region
      _
    $region21: #{self_attention.1} parent=1 // pred_fallthru
      _
    %v21 = vld [vmem:[%s0] sm:$0xff]
    %v22 = vld [vmem:[%s0 + $0x8] sm:$0xff]
    %v23 = vlaneseq
    %v24 = vshrl.u32 %v23, 7
    %v25 = vadd.s32 %v24, 8
    %v26 = vlaneseq
    %v27 = vand.u32 %v26, 127
    %v28 = vshra.s32 %v24, 3
    %v29 = vshra.s32 %v25, 3
    %v30 = vshra.s32 %v27, 3
    %vm31 = vcmp.eq.s32.totalorder %v28, %v30
    %vm32 = vcmp.eq.s32.totalorder %v29, %v30
    %v33 = vsel %vm31, 0.0, -1e+30
    %v34 = vsel %vm32, 0.0, -1e+30
    %v35 = vld [vmem:[%s1] sm:$0xff]
    %v36 = vld [vmem:[%s1 + $0x8] sm:$0xff]
    %v37 = vld [vmem:[%s1 + $0x10] sm:$0xff]
    %v38 = vld [vmem:[%s1 + $0x18] sm:$0xff]
    %v39 = vld [vmem:[%s2] sm:$0x1]
    %v41 = vlaneseq
    %v42 = vshrl.u32 %v41, 7
    %v43 = vsub.s32 0, %v42
    %v44 = vrot.slane %v39, %v43
    %vm46 = vcmask 261120
    %v48 = vsel %vm46, %v21, 0
    %v51 = vsel %vm46, %v22, 0
    %53 = vmatprep.subr.mxu0 0.0
    %54 = vmatpush1.msra.mxu0 %v35
    %55 = vmatprep.subr.mxu0 0.0
    %56 = vmatpush1.msra.mxu0 %v36
    %57 = vmatprep.subr.mxu0 0.0
    %58 = vmatpush1.msra.mxu0 %v37
    %59 = vmatprep.subr.mxu0 0.0
    %60 = vmatpush1.msra.mxu0 %v38
    %61 = vmatprep.subr.mxu0 0.0
    %62 = vmatpush1.msra.mxu0 0.0
    %63 = vmatprep.subr.mxu0 0.0
    %64 = vmatpush1.msra.mxu0 0.0
    %65 = vmatprep.subr.mxu0 0.0
    %66 = vmatpush1.msra.mxu0 0.0
    %67 = vmatprep.subr.mxu0 0.0
    %68 = vmatpush1.msra.mxu0 0.0
    %69 = vmatprep.subr.mxu0 0.0
    %70 = vmatpush1.msra.mxu0 0.0
    %71 = vmatprep.subr.mxu0 0.0
    %72 = vmatpush1.msra.mxu0 0.0
    %73 = vmatprep.subr.mxu0 0.0
    %74 = vmatpush1.msra.mxu0 0.0
    %75 = vmatprep.subr.mxu0 0.0
    %76 = vmatpush1.msra.mxu0 0.0
    %77 = vmatprep.subr.mxu0 0.0
    %78 = vmatpush1.msra.mxu0 0.0
    %79 = vmatprep.subr.mxu0 0.0
    %80 = vmatpush1.msra.mxu0 0.0
    %81 = vmatprep.subr.mxu0 0.0
    %82 = vmatpush1.msra.mxu0 0.0
    %83 = vmatprep.subr.mxu0 0.0
    %84 = vmatpush1.msra.mxu0 0.0
    %85 = vmatprep.subr.mxu0 0.0
    %86 = vmatpush1.msra.mxu0 0.0
    %87 = vmatprep.subr.mxu0 0.0
    %88 = vmatpush1.msra.mxu0 0.0
    %89 = vmatprep.subr.mxu0 0.0
    %90 = vmatpush1.msra.mxu0 0.0
    %91 = vmatprep.subr.mxu0 0.0
    %92 = vmatpush1.msra.mxu0 0.0
    %93 = vmatprep.subr.mxu0 0.0
    %94 = vmatpush1.msra.mxu0 0.0
    %95 = vmatprep.subr.mxu0 0.0
    %96 = vmatpush1.msra.mxu0 0.0
    %97 = vmatprep.subr.mxu0 0.0
    %98 = vmatpush1.msra.mxu0 0.0
    %99 = vmatprep.subr.mxu0 0.0
    %100 = vmatpush1.msra.mxu0 0.0
    %101 = vmatprep.subr.mxu0 0.0
    %102 = vmatpush1.msra.mxu0 0.0
    %103 = vmatprep.subr.mxu0 0.0
    %104 = vmatpush1.msra.mxu0 0.0
    %105 = vmatprep.subr.mxu0 0.0
    %106 = vmatpush1.msra.mxu0 0.0
    %107 = vmatprep.subr.mxu0 0.0
    %108 = vmatpush1.msra.mxu0 0.0
    %109 = vmatprep.subr.mxu0 0.0
    %110 = vmatpush1.msra.mxu0 0.0
    %111 = vmatprep.subr.mxu0 0.0
    %112 = vmatpush1.msra.mxu0 0.0
    %113 = vmatprep.subr.mxu0 0.0
    %114 = vmatpush1.msra.mxu0 0.0
    %115 = vmatprep.subr.mxu0 0.0
    %116 = vmatpush1.msra.mxu0 0.0
    %117 = vmatprep.mubr.f32.mxu0 0.0
    %118 = vmatmul.mubr.f32.gmra.mrb[0].mxu0 %v48
    %v119 = vpop.f32.mrb[0].mxu0
    %v120 = vadd.f32 %v44, %v119
    %v121 = vpop.f32.mrb[0].mxu0
    %122 = vmatprep.mubr.f32.mxu0 0.0
    %123 = vmatmul.mubr.f32.gmra.mrb[0].mxu0 %v51
    %v124 = vpop.f32.mrb[0].mxu0
    %v125 = vadd.f32 %v44, %v124
    %v126 = vpop.f32.mrb[0].mxu0
    %127 = vdwg.mxu0
    %s128 = scalar_lea.vmem %s1, 128
    %v129 = vld [vmem:[%s128] sm:$0xff]
    %v130 = vld [vmem:[%s128 + $0x8] sm:$0xff]
    %v131 = vld [vmem:[%s128 + $0x10] sm:$0xff]
    %v132 = vld [vmem:[%s128 + $0x18] sm:$0xff]
    %s133 = scalar_lea.vmem %s2, 4
    %v134 = vld [vmem:[%s133] sm:$0x1]
    %v136 = vlaneseq
    %v137 = vshrl.u32 %v136, 7
    %v138 = vsub.s32 0, %v137
    %v139 = vrot.slane %v134, %v138
    %141 = vmatprep.subr.mxu0 0.0
    %142 = vmatpush1.msra.mxu0 %v129
    %143 = vmatprep.subr.mxu0 0.0
    %144 = vmatpush1.msra.mxu0 %v130
    %145 = vmatprep.subr.mxu0 0.0
    %146 = vmatpush1.msra.mxu0 %v131
    %147 = vmatprep.subr.mxu0 0.0
    %148 = vmatpush1.msra.mxu0 %v132
    %149 = vmatprep.subr.mxu0 0.0
    %150 = vmatpush1.msra.mxu0 0.0
    %151 = vmatprep.subr.mxu0 0.0
    %152 = vmatpush1.msra.mxu0 0.0
    %153 = vmatprep.subr.mxu0 0.0
    %154 = vmatpush1.msra.mxu0 0.0
    %155 = vmatprep.subr.mxu0 0.0
    %156 = vmatpush1.msra.mxu0 0.0
    %157 = vmatprep.subr.mxu0 0.0
    %158 = vmatpush1.msra.mxu0 0.0
    %159 = vmatprep.subr.mxu0 0.0
    %160 = vmatpush1.msra.mxu0 0.0
    %161 = vmatprep.subr.mxu0 0.0
    %162 = vmatpush1.msra.mxu0 0.0
    %163 = vmatprep.subr.mxu0 0.0
    %164 = vmatpush1.msra.mxu0 0.0
    %165 = vmatprep.subr.mxu0 0.0
    %166 = vmatpush1.msra.mxu0 0.0
    %167 = vmatprep.subr.mxu0 0.0
    %168 = vmatpush1.msra.mxu0 0.0
    %169 = vmatprep.subr.mxu0 0.0
    %170 = vmatpush1.msra.mxu0 0.0
    %171 = vmatprep.subr.mxu0 0.0
    %172 = vmatpush1.msra.mxu0 0.0
    %173 = vmatprep.subr.mxu0 0.0
    %174 = vmatpush1.msra.mxu0 0.0
    %175 = vmatprep.subr.mxu0 0.0
    %176 = vmatpush1.msra.mxu0 0.0
    %177 = vmatprep.subr.mxu0 0.0
    %178 = vmatpush1.msra.mxu0 0.0
    %179 = vmatprep.subr.mxu0 0.0
    %180 = vmatpush1.msra.mxu0 0.0
    %181 = vmatprep.subr.mxu0 0.0
    %182 = vmatpush1.msra.mxu0 0.0
    %183 = vmatprep.subr.mxu0 0.0
    %184 = vmatpush1.msra.mxu0 0.0
    %185 = vmatprep.subr.mxu0 0.0
    %186 = vmatpush1.msra.mxu0 0.0
    %187 = vmatprep.subr.mxu0 0.0
    %188 = vmatpush1.msra.mxu0 0.0
    %189 = vmatprep.subr.mxu0 0.0
    %190 = vmatpush1.msra.mxu0 0.0
    %191 = vmatprep.subr.mxu0 0.0
    %192 = vmatpush1.msra.mxu0 0.0
    %193 = vmatprep.subr.mxu0 0.0
    %194 = vmatpush1.msra.mxu0 0.0
    %195 = vmatprep.subr.mxu0 0.0
    %196 = vmatpush1.msra.mxu0 0.0
    %197 = vmatprep.subr.mxu0 0.0
    %198 = vmatpush1.msra.mxu0 0.0
    %199 = vmatprep.subr.mxu0 0.0
    %200 = vmatpush1.msra.mxu0 0.0
    %201 = vmatprep.subr.mxu0 0.0
    %202 = vmatpush1.msra.mxu0 0.0
    %203 = vmatprep.subr.mxu0 0.0
    %204 = vmatpush1.msra.mxu0 0.0
    %205 = vmatprep.mubr.f32.mxu0 0.0
    %206 = vmatmul.mubr.f32.gmra.mrb[0].mxu0 %v48
    %v207 = vpop.f32.mrb[0].mxu0
    %v208 = vadd.f32 %v139, %v207
    %v209 = vpop.f32.mrb[0].mxu0
    %210 = vmatprep.mubr.f32.mxu0 0.0
    %211 = vmatmul.mubr.f32.gmra.mrb[0].mxu0 %v51
    %v212 = vpop.f32.mrb[0].mxu0
    %v213 = vadd.f32 %v139, %v212
    %v214 = vpop.f32.mrb[0].mxu0
    %215 = vdwg.mxu0
    %s216 = scalar_lea.vmem %s1, 256
    %v217 = vld [vmem:[%s216] sm:$0xff]
    %v218 = vld [vmem:[%s216 + $0x8] sm:$0xff]
    %v219 = vld [vmem:[%s216 + $0x10] sm:$0xff]
    %v220 = vld [vmem:[%s216 + $0x18] sm:$0xff]
    %s221 = scalar_lea.vmem %s2, 8
    %v222 = vld [vmem:[%s221] sm:$0x1]
    %v224 = vlaneseq
    %v225 = vshrl.u32 %v224, 7
    %v226 = vsub.s32 0, %v225
    %v227 = vrot.slane %v222, %v226
    %229 = vmatprep.subr.mxu0 0.0
    %230 = vmatpush1.msra.mxu0 %v217
    %231 = vmatprep.subr.mxu0 0.0
    %232 = vmatpush1.msra.mxu0 %v218
    %233 = vmatprep.subr.mxu0 0.0
    %234 = vmatpush1.msra.mxu0 %v219
    %235 = vmatprep.subr.mxu0 0.0
    %236 = vmatpush1.msra.mxu0 %v220
    %237 = vmatprep.subr.mxu0 0.0
    %238 = vmatpush1.msra.mxu0 0.0
    %239 = vmatprep.subr.mxu0 0.0
    %240 = vmatpush1.msra.mxu0 0.0
    %241 = vmatprep.subr.mxu0 0.0
    %242 = vmatpush1.msra.mxu0 0.0
    %243 = vmatprep.subr.mxu0 0.0
    %244 = vmatpush1.msra.mxu0 0.0
    %245 = vmatprep.subr.mxu0 0.0
    %246 = vmatpush1.msra.mxu0 0.0
    %247 = vmatprep.subr.mxu0 0.0
    %248 = vmatpush1.msra.mxu0 0.0
    %249 = vmatprep.subr.mxu0 0.0
    %250 = vmatpush1.msra.mxu0 0.0
    %251 = vmatprep.subr.mxu0 0.0
    %252 = vmatpush1.msra.mxu0 0.0
    %253 = vmatprep.subr.mxu0 0.0
    %254 = vmatpush1.msra.mxu0 0.0
    %255 = vmatprep.subr.mxu0 0.0
    %256 = vmatpush1.msra.mxu0 0.0
    %257 = vmatprep.subr.mxu0 0.0
    %258 = vmatpush1.msra.mxu0 0.0
    %259 = vmatprep.subr.mxu0 0.0
    %260 = vmatpush1.msra.mxu0 0.0
    %261 = vmatprep.subr.mxu0 0.0
    %262 = vmatpush1.msra.mxu0 0.0
    %263 = vmatprep.subr.mxu0 0.0
    %264 = vmatpush1.msra.mxu0 0.0
    %265 = vmatprep.subr.mxu0 0.0
    %266 = vmatpush1.msra.mxu0 0.0
    %267 = vmatprep.subr.mxu0 0.0
    %268 = vmatpush1.msra.mxu0 0.0
    %269 = vmatprep.subr.mxu0 0.0
    %270 = vmatpush1.msra.mxu0 0.0
    %271 = vmatprep.subr.mxu0 0.0
    %272 = vmatpush1.msra.mxu0 0.0
    %273 = vmatprep.subr.mxu0 0.0
    %274 = vmatpush1.msra.mxu0 0.0
    %275 = vmatprep.subr.mxu0 0.0
    %276 = vmatpush1.msra.mxu0 0.0
    %277 = vmatprep.subr.mxu0 0.0
    %278 = vmatpush1.msra.mxu0 0.0
    %279 = vmatprep.subr.mxu0 0.0
    %280 = vmatpush1.msra.mxu0 0.0
    %281 = vmatprep.subr.mxu0 0.0
    %282 = vmatpush1.msra.mxu0 0.0
    %283 = vmatprep.subr.mxu0 0.0
    %284 = vmatpush1.msra.mxu0 0.0
    %285 = vmatprep.subr.mxu0 0.0
    %286 = vmatpush1.msra.mxu0 0.0
    %287 = vmatprep.subr.mxu0 0.0
    %288 = vmatpush1.msra.mxu0 0.0
    %289 = vmatprep.subr.mxu0 0.0
    %290 = vmatpush1.msra.mxu0 0.0
    %291 = vmatprep.subr.mxu0 0.0
    %292 = vmatpush1.msra.mxu0 0.0
    %293 = vmatprep.mubr.f32.mxu0 0.0
    %294 = vmatmul.mubr.f32.gmra.mrb[0].mxu0 %v48
    %v295 = vpop.f32.mrb[0].mxu0
    %v296 = vadd.f32 %v227, %v295
    %v297 = vpop.f32.mrb[0].mxu0
    %298 = vmatprep.mubr.f32.mxu0 0.0
    %299 = vmatmul.mubr.f32.gmra.mrb[0].mxu0 %v51
    %v300 = vpop.f32.mrb[0].mxu0
    %v301 = vadd.f32 %v227, %v300
    %v302 = vpop.f32.mrb[0].mxu0
    %303 = vdwg.mxu0
    %vm304 = vcmask 64512
    %v306 = vsel %vm304, %v120, 0
    %v309 = vsel %vm304, %v125, 0
    %v312 = vsel %vm304, %v208, 0
    %v315 = vsel %vm304, %v213, 0
    %317 = vmatprep.subr.mxu0 0.0
    %318 = vmatpush1.xpose.msra.mxu0 %v312
    %319 = vmatprep.subr.mxu0 0.0
    %320 = vmatpush1.xpose.msra.mxu0 %v315
    %321 = vmatprep.subr.mxu0 0.0
    %322 = vmatpush1.xpose.msra.mxu0 0.0
    %323 = vmatprep.subr.mxu0 0.0
    %324 = vmatpush1.xpose.msra.mxu0 0.0
    %325 = vmatprep.subr.mxu0 0.0
    %326 = vmatpush1.xpose.msra.mxu0 0.0
    %327 = vmatprep.subr.mxu0 0.0
    %328 = vmatpush1.xpose.msra.mxu0 0.0
    %329 = vmatprep.subr.mxu0 0.0
    %330 = vmatpush1.xpose.msra.mxu0 0.0
    %331 = vmatprep.subr.mxu0 0.0
    %332 = vmatpush1.xpose.msra.mxu0 0.0
    %333 = vmatprep.subr.mxu0 0.0
    %334 = vmatpush1.xpose.msra.mxu0 0.0
    %335 = vmatprep.subr.mxu0 0.0
    %336 = vmatpush1.xpose.msra.mxu0 0.0
    %337 = vmatprep.subr.mxu0 0.0
    %338 = vmatpush1.xpose.msra.mxu0 0.0
    %339 = vmatprep.subr.mxu0 0.0
    %340 = vmatpush1.xpose.msra.mxu0 0.0
    %341 = vmatprep.subr.mxu0 0.0
    %342 = vmatpush1.xpose.msra.mxu0 0.0
    %343 = vmatprep.subr.mxu0 0.0
    %344 = vmatpush1.xpose.msra.mxu0 0.0
    %345 = vmatprep.subr.mxu0 0.0
    %346 = vmatpush1.xpose.msra.mxu0 0.0
    %347 = vmatprep.subr.mxu0 0.0
    %348 = vmatpush1.xpose.msra.mxu0 0.0
    %349 = vmatprep.subr.mxu0 0.0
    %350 = vmatpush1.xpose.msra.mxu0 0.0
    %351 = vmatprep.subr.mxu0 0.0
    %352 = vmatpush1.xpose.msra.mxu0 0.0
    %353 = vmatprep.subr.mxu0 0.0
    %354 = vmatpush1.xpose.msra.mxu0 0.0
    %355 = vmatprep.subr.mxu0 0.0
    %356 = vmatpush1.xpose.msra.mxu0 0.0
    %357 = vmatprep.subr.mxu0 0.0
    %358 = vmatpush1.xpose.msra.mxu0 0.0
    %359 = vmatprep.subr.mxu0 0.0
    %360 = vmatpush1.xpose.msra.mxu0 0.0
    %361 = vmatprep.subr.mxu0 0.0
    %362 = vmatpush1.xpose.msra.mxu0 0.0
    %363 = vmatprep.subr.mxu0 0.0
    %364 = vmatpush1.xpose.msra.mxu0 0.0
    %365 = vmatprep.subr.mxu0 0.0
    %366 = vmatpush1.xpose.msra.mxu0 0.0
    %367 = vmatprep.subr.mxu0 0.0
    %368 = vmatpush1.xpose.msra.mxu0 0.0
    %369 = vmatprep.subr.mxu0 0.0
    %370 = vmatpush1.xpose.msra.mxu0 0.0
    %371 = vmatprep.subr.mxu0 0.0
    %372 = vmatpush1.xpose.msra.mxu0 0.0
    %373 = vmatprep.subr.mxu0 0.0
    %374 = vmatpush1.xpose.msra.mxu0 0.0
    %375 = vmatprep.subr.mxu0 0.0
    %376 = vmatpush1.xpose.msra.mxu0 0.0
    %377 = vmatprep.subr.mxu0 0.0
    %378 = vmatpush1.xpose.msra.mxu0 0.0
    %379 = vmatprep.subr.mxu0 0.0
    %380 = vmatpush1.xpose.msra.mxu0 0.0
    %381 = vmatprep.mubr.f32.mxu0 0.0
    %382 = vmatmul.mubr.f32.gmra.mrb[0].mxu0 %v306
    %v383 = vpop.f32.mrb[0].mxu0
    %v384 = vadd.f32 %v33, %v383
    %v385 = vpop.f32.mrb[0].mxu0
    %386 = vmatprep.mubr.f32.mxu0 0.0
    %387 = vmatmul.mubr.f32.gmra.mrb[0].mxu0 %v309
    %v388 = vpop.f32.mrb[0].mxu0
    %v389 = vadd.f32 %v34, %v388
    %v390 = vpop.f32.mrb[0].mxu0
    %391 = vdwg.mxu0
    %vm392 = vcmask 130048
    %v393 = vsel %vm392, %v384, -inf
    %394 = vmax.xlane.f32.xlu0 %v393
    %v395 = vpop.xlane.xlu0 %394
    %v396 = vsel %vm392, %v389, -inf
    %397 = vmax.xlane.f32.xlu0 %v396
    %v398 = vpop.xlane.xlu0 %397
    %v399 = vsub.f32 %v384, %v395
    %v400 = vsub.f32 %v389, %v398
    %v401 = vmul.f32 %v399, 1.442695
    %v402 = vpow.pop %v401
    %v403 = vmul.f32 %v400, 1.442695
    %v404 = vpow.pop %v403
    %v405 = vsel %vm392, %v402, 0.0
    %406 = vadd.xlane.f32.xlu0 %v405
    %v407 = vpop.xlane.xlu0 %406
    %v408 = vsel %vm392, %v404, 0.0
    %409 = vadd.xlane.f32.xlu0 %v408
    %v410 = vpop.xlane.xlu0 %409
    %v411 = vrcp.pop %v407
    %v412 = vrcp.pop %v410
    %v414 = vsel %vm392, %v402, 0
    %v417 = vsel %vm392, %v404, 0
    %419 = vmatprep.subr.mxu0 0.0
    %420 = vmatpush1.msra.mxu0 %v296
    %421 = vmatprep.subr.mxu0 0.0
    %422 = vmatpush1.msra.mxu0 %v301
    %423 = vmatprep.subr.mxu0 0.0
    %424 = vmatpush1.msra.mxu0 0.0
    %425 = vmatprep.subr.mxu0 0.0
    %426 = vmatpush1.msra.mxu0 0.0
    %427 = vmatprep.subr.mxu0 0.0
    %428 = vmatpush1.msra.mxu0 0.0
    %429 = vmatprep.subr.mxu0 0.0
    %430 = vmatpush1.msra.mxu0 0.0
    %431 = vmatprep.subr.mxu0 0.0
    %432 = vmatpush1.msra.mxu0 0.0
    %433 = vmatprep.subr.mxu0 0.0
    %434 = vmatpush1.msra.mxu0 0.0
    %435 = vmatprep.subr.mxu0 0.0
    %436 = vmatpush1.msra.mxu0 0.0
    %437 = vmatprep.subr.mxu0 0.0
    %438 = vmatpush1.msra.mxu0 0.0
    %439 = vmatprep.subr.mxu0 0.0
    %440 = vmatpush1.msra.mxu0 0.0
    %441 = vmatprep.subr.mxu0 0.0
    %442 = vmatpush1.msra.mxu0 0.0
    %443 = vmatprep.subr.mxu0 0.0
    %444 = vmatpush1.msra.mxu0 0.0
    %445 = vmatprep.subr.mxu0 0.0
    %446 = vmatpush1.msra.mxu0 0.0
    %447 = vmatprep.subr.mxu0 0.0
    %448 = vmatpush1.msra.mxu0 0.0
    %449 = vmatprep.subr.mxu0 0.0
    %450 = vmatpush1.msra.mxu0 0.0
    %451 = vmatprep.subr.mxu0 0.0
    %452 = vmatpush1.msra.mxu0 0.0
    %453 = vmatprep.subr.mxu0 0.0
    %454 = vmatpush1.msra.mxu0 0.0
    %455 = vmatprep.subr.mxu0 0.0
    %456 = vmatpush1.msra.mxu0 0.0
    %457 = vmatprep.subr.mxu0 0.0
    %458 = vmatpush1.msra.mxu0 0.0
    %459 = vmatprep.subr.mxu0 0.0
    %460 = vmatpush1.msra.mxu0 0.0
    %461 = vmatprep.subr.mxu0 0.0
    %462 = vmatpush1.msra.mxu0 0.0
    %463 = vmatprep.subr.mxu0 0.0
    %464 = vmatpush1.msra.mxu0 0.0
    %465 = vmatprep.subr.mxu0 0.0
    %466 = vmatpush1.msra.mxu0 0.0
    %467 = vmatprep.subr.mxu0 0.0
    %468 = vmatpush1.msra.mxu0 0.0
    %469 = vmatprep.subr.mxu0 0.0
    %470 = vmatpush1.msra.mxu0 0.0
    %471 = vmatprep.subr.mxu0 0.0
    %472 = vmatpush1.msra.mxu0 0.0
    %473 = vmatprep.subr.mxu0 0.0
    %474 = vmatpush1.msra.mxu0 0.0
    %475 = vmatprep.subr.mxu0 0.0
    %476 = vmatpush1.msra.mxu0 0.0
    %477 = vmatprep.subr.mxu0 0.0
    %478 = vmatpush1.msra.mxu0 0.0
    %479 = vmatprep.subr.mxu0 0.0
    %480 = vmatpush1.msra.mxu0 0.0
    %481 = vmatprep.subr.mxu0 0.0
    %482 = vmatpush1.msra.mxu0 0.0
    %483 = vmatprep.mubr.f32.mxu0 0.0
    %484 = vmatmul.mubr.f32.gmra.mrb[0].mxu0 %v414
    %v485 = vpop.f32.mrb[0].mxu0
    %v486 = vadd.f32 0.0, %v485
    %v487 = vpop.f32.mrb[0].mxu0
    %488 = vmatprep.mubr.f32.mxu0 0.0
    %489 = vmatmul.mubr.f32.gmra.mrb[0].mxu0 %v417
    %v490 = vpop.f32.mrb[0].mxu0
    %v491 = vadd.f32 0.0, %v490
    %v492 = vpop.f32.mrb[0].mxu0
    %493 = vdwg.mxu0
    %v494 = vmul.f32 %v486, %v411
    %v495 = vmul.f32 %v491, %v412
    %v496 = vld [vmem:[%s3] sm:$0xff]
    %s497 = scalar_lea.vmem %s1, 32
    %v498 = vld [vmem:[%s497] sm:$0xff]
    %v499 = vld [vmem:[%s497 + $0x8] sm:$0xff]
    %v500 = vld [vmem:[%s497 + $0x10] sm:$0xff]
    %v501 = vld [vmem:[%s497 + $0x18] sm:$0xff]
    %s502 = scalar_lea.vmem %s2, 1
    %v503 = vld [vmem:[%s502] sm:$0x1]
    %v505 = vlaneseq
    %v506 = vshrl.u32 %v505, 7
    %v507 = vsub.s32 0, %v506
    %v508 = vrot.slane %v503, %v507
    %510 = vmatprep.subr.mxu0 0.0
    %511 = vmatpush1.msra.mxu0 %v498
    %512 = vmatprep.subr.mxu0 0.0
    %513 = vmatpush1.msra.mxu0 %v499
    %514 = vmatprep.subr.mxu0 0.0
    %515 = vmatpush1.msra.mxu0 %v500
    %516 = vmatprep.subr.mxu0 0.0
    %517 = vmatpush1.msra.mxu0 %v501
    %518 = vmatprep.subr.mxu0 0.0
    %519 = vmatpush1.msra.mxu0 0.0
    %520 = vmatprep.subr.mxu0 0.0
    %521 = vmatpush1.msra.mxu0 0.0
    %522 = vmatprep.subr.mxu0 0.0
    %523 = vmatpush1.msra.mxu0 0.0
    %524 = vmatprep.subr.mxu0 0.0
    %525 = vmatpush1.msra.mxu0 0.0
    %526 = vmatprep.subr.mxu0 0.0
    %527 = vmatpush1.msra.mxu0 0.0
    %528 = vmatprep.subr.mxu0 0.0
    %529 = vmatpush1.msra.mxu0 0.0
    %530 = vmatprep.subr.mxu0 0.0
    %531 = vmatpush1.msra.mxu0 0.0
    %532 = vmatprep.subr.mxu0 0.0
    %533 = vmatpush1.msra.mxu0 0.0
    %534 = vmatprep.subr.mxu0 0.0
    %535 = vmatpush1.msra.mxu0 0.0
    %536 = vmatprep.subr.mxu0 0.0
    %537 = vmatpush1.msra.mxu0 0.0
    %538 = vmatprep.subr.mxu0 0.0
    %539 = vmatpush1.msra.mxu0 0.0
    %540 = vmatprep.subr.mxu0 0.0
    %541 = vmatpush1.msra.mxu0 0.0
    %542 = vmatprep.subr.mxu0 0.0
    %543 = vmatpush1.msra.mxu0 0.0
    %544 = vmatprep.subr.mxu0 0.0
    %545 = vmatpush1.msra.mxu0 0.0
    %546 = vmatprep.subr.mxu0 0.0
    %547 = vmatpush1.msra.mxu0 0.0
    %548 = vmatprep.subr.mxu0 0.0
    %549 = vmatpush1.msra.mxu0 0.0
    %550 = vmatprep.subr.mxu0 0.0
    %551 = vmatpush1.msra.mxu0 0.0
    %552 = vmatprep.subr.mxu0 0.0
    %553 = vmatpush1.msra.mxu0 0.0
    %554 = vmatprep.subr.mxu0 0.0
    %555 = vmatpush1.msra.mxu0 0.0
    %556 = vmatprep.subr.mxu0 0.0
    %557 = vmatpush1.msra.mxu0 0.0
    %558 = vmatprep.subr.mxu0 0.0
    %559 = vmatpush1.msra.mxu0 0.0
    %560 = vmatprep.subr.mxu0 0.0
    %561 = vmatpush1.msra.mxu0 0.0
    %562 = vmatprep.subr.mxu0 0.0
    %563 = vmatpush1.msra.mxu0 0.0
    %564 = vmatprep.subr.mxu0 0.0
    %565 = vmatpush1.msra.mxu0 0.0
    %566 = vmatprep.subr.mxu0 0.0
    %567 = vmatpush1.msra.mxu0 0.0
    %568 = vmatprep.subr.mxu0 0.0
    %569 = vmatpush1.msra.mxu0 0.0
    %570 = vmatprep.subr.mxu0 0.0
    %571 = vmatpush1.msra.mxu0 0.0
    %572 = vmatprep.subr.mxu0 0.0
    %573 = vmatpush1.msra.mxu0 0.0
    %574 = vmatprep.mubr.f32.mxu0 0.0
    %575 = vmatmul.mubr.f32.gmra.mrb[0].mxu0 %v48
    %v576 = vpop.f32.mrb[0].mxu0
    %v577 = vadd.f32 %v508, %v576
    %v578 = vpop.f32.mrb[0].mxu0
    %579 = vmatprep.mubr.f32.mxu0 0.0
    %580 = vmatmul.mubr.f32.gmra.mrb[0].mxu0 %v51
    %v581 = vpop.f32.mrb[0].mxu0
    %v582 = vadd.f32 %v508, %v581
    %v583 = vpop.f32.mrb[0].mxu0
    %584 = vdwg.mxu0
    %s585 = scalar_lea.vmem %s1, 160
    %v586 = vld [vmem:[%s585] sm:$0xff]
    %v587 = vld [vmem:[%s585 + $0x8] sm:$0xff]
    %v588 = vld [vmem:[%s585 + $0x10] sm:$0xff]
    %v589 = vld [vmem:[%s585 + $0x18] sm:$0xff]
    %s590 = scalar_lea.vmem %s2, 5
    %v591 = vld [vmem:[%s590] sm:$0x1]
    %v593 = vlaneseq
    %v594 = vshrl.u32 %v593, 7
    %v595 = vsub.s32 0, %v594
    %v596 = vrot.slane %v591, %v595
    %598 = vmatprep.subr.mxu0 0.0
    %599 = vmatpush1.msra.mxu0 %v586
    %600 = vmatprep.subr.mxu0 0.0
    %601 = vmatpush1.msra.mxu0 %v587
    %602 = vmatprep.subr.mxu0 0.0
    %603 = vmatpush1.msra.mxu0 %v588
    %604 = vmatprep.subr.mxu0 0.0
    %605 = vmatpush1.msra.mxu0 %v589
    %606 = vmatprep.subr.mxu0 0.0
    %607 = vmatpush1.msra.mxu0 0.0
    %608 = vmatprep.subr.mxu0 0.0
    %609 = vmatpush1.msra.mxu0 0.0
    %610 = vmatprep.subr.mxu0 0.0
    %611 = vmatpush1.msra.mxu0 0.0
    %612 = vmatprep.subr.mxu0 0.0
    %613 = vmatpush1.msra.mxu0 0.0
    %614 = vmatprep.subr.mxu0 0.0
    %615 = vmatpush1.msra.mxu0 0.0
    %616 = vmatprep.subr.mxu0 0.0
    %617 = vmatpush1.msra.mxu0 0.0
    %618 = vmatprep.subr.mxu0 0.0
    %619 = vmatpush1.msra.mxu0 0.0
    %620 = vmatprep.subr.mxu0 0.0
    %621 = vmatpush1.msra.mxu0 0.0
    %622 = vmatprep.subr.mxu0 0.0
    %623 = vmatpush1.msra.mxu0 0.0
    %624 = vmatprep.subr.mxu0 0.0
    %625 = vmatpush1.msra.mxu0 0.0
    %626 = vmatprep.subr.mxu0 0.0
    %627 = vmatpush1.msra.mxu0 0.0
    %628 = vmatprep.subr.mxu0 0.0
    %629 = vmatpush1.msra.mxu0 0.0
    %630 = vmatprep.subr.mxu0 0.0
    %631 = vmatpush1.msra.mxu0 0.0
    %632 = vmatprep.subr.mxu0 0.0
    %633 = vmatpush1.msra.mxu0 0.0
    %634 = vmatprep.subr.mxu0 0.0
    %635 = vmatpush1.msra.mxu0 0.0
    %636 = vmatprep.subr.mxu0 0.0
    %637 = vmatpush1.msra.mxu0 0.0
    %638 = vmatprep.subr.mxu0 0.0
    %639 = vmatpush1.msra.mxu0 0.0
    %640 = vmatprep.subr.mxu0 0.0
    %641 = vmatpush1.msra.mxu0 0.0
    %642 = vmatprep.subr.mxu0 0.0
    %643 = vmatpush1.msra.mxu0 0.0
    %644 = vmatprep.subr.mxu0 0.0
    %645 = vmatpush1.msra.mxu0 0.0
    %646 = vmatprep.subr.mxu0 0.0
    %647 = vmatpush1.msra.mxu0 0.0
    %648 = vmatprep.subr.mxu0 0.0
    %649 = vmatpush1.msra.mxu0 0.0
    %650 = vmatprep.subr.mxu0 0.0
    %651 = vmatpush1.msra.mxu0 0.0
    %652 = vmatprep.subr.mxu0 0.0
    %653 = vmatpush1.msra.mxu0 0.0
    %654 = vmatprep.subr.mxu0 0.0
    %655 = vmatpush1.msra.mxu0 0.0
    %656 = vmatprep.subr.mxu0 0.0
    %657 = vmatpush1.msra.mxu0 0.0
    %658 = vmatprep.subr.mxu0 0.0
    %659 = vmatpush1.msra.mxu0 0.0
    %660 = vmatprep.subr.mxu0 0.0
    %661 = vmatpush1.msra.mxu0 0.0
    %662 = vmatprep.mubr.f32.mxu0 0.0
    %663 = vmatmul.mubr.f32.gmra.mrb[0].mxu0 %v48
    %v664 = vpop.f32.mrb[0].mxu0
    %v665 = vadd.f32 %v596, %v664
    %v666 = vpop.f32.mrb[0].mxu0
    %667 = vmatprep.mubr.f32.mxu0 0.0
    %668 = vmatmul.mubr.f32.gmra.mrb[0].mxu0 %v51
    %v669 = vpop.f32.mrb[0].mxu0
    %v670 = vadd.f32 %v596, %v669
    %v671 = vpop.f32.mrb[0].mxu0
    %672 = vdwg.mxu0
    %s673 = scalar_lea.vmem %s1, 288
    %v674 = vld [vmem:[%s673] sm:$0xff]
    %v675 = vld [vmem:[%s673 + $0x8] sm:$0xff]
    %v676 = vld [vmem:[%s673 + $0x10] sm:$0xff]
    %v677 = vld [vmem:[%s673 + $0x18] sm:$0xff]
    %s678 = scalar_lea.vmem %s2, 9
    %v679 = vld [vmem:[%s678] sm:$0x1]
    %v681 = vlaneseq
    %v682 = vshrl.u32 %v681, 7
    %v683 = vsub.s32 0, %v682
    %v684 = vrot.slane %v679, %v683
    %686 = vmatprep.subr.mxu0 0.0
    %687 = vmatpush1.msra.mxu0 %v674
    %688 = vmatprep.subr.mxu0 0.0
    %689 = vmatpush1.msra.mxu0 %v675
    %690 = vmatprep.subr.mxu0 0.0
    %691 = vmatpush1.msra.mxu0 %v676
    %692 = vmatprep.subr.mxu0 0.0
    %693 = vmatpush1.msra.mxu0 %v677
    %694 = vmatprep.subr.mxu0 0.0
    %695 = vmatpush1.msra.mxu0 0.0
    %696 = vmatprep.subr.mxu0 0.0
    %697 = vmatpush1.msra.mxu0 0.0
    %698 = vmatprep.subr.mxu0 0.0
    %699 = vmatpush1.msra.mxu0 0.0
    %700 = vmatprep.subr.mxu0 0.0
    %701 = vmatpush1.msra.mxu0 0.0
    %702 = vmatprep.subr.mxu0 0.0
    %703 = vmatpush1.msra.mxu0 0.0
    %704 = vmatprep.subr.mxu0 0.0
    %705 = vmatpush1.msra.mxu0 0.0
    %706 = vmatprep.subr.mxu0 0.0
    %707 = vmatpush1.msra.mxu0 0.0
    %708 = vmatprep.subr.mxu0 0.0
    %709 = vmatpush1.msra.mxu0 0.0
    %710 = vmatprep.subr.mxu0 0.0
    %711 = vmatpush1.msra.mxu0 0.0
    %712 = vmatprep.subr.mxu0 0.0
    %713 = vmatpush1.msra.mxu0 0.0
    %714 = vmatprep.subr.mxu0 0.0
    %715 = vmatpush1.msra.mxu0 0.0
    %716 = vmatprep.subr.mxu0 0.0
    %717 = vmatpush1.msra.mxu0 0.0
    %718 = vmatprep.subr.mxu0 0.0
    %719 = vmatpush1.msra.mxu0 0.0
    %720 = vmatprep.subr.mxu0 0.0
    %721 = vmatpush1.msra.mxu0 0.0
    %722 = vmatprep.subr.mxu0 0.0
    %723 = vmatpush1.msra.mxu0 0.0
    %724 = vmatprep.subr.mxu0 0.0
    %725 = vmatpush1.msra.mxu0 0.0
    %726 = vmatprep.subr.mxu0 0.0
    %727 = vmatpush1.msra.mxu0 0.0
    %728 = vmatprep.subr.mxu0 0.0
    %729 = vmatpush1.msra.mxu0 0.0
    %730 = vmatprep.subr.mxu0 0.0
    %731 = vmatpush1.msra.mxu0 0.0
    %732 = vmatprep.subr.mxu0 0.0
    %733 = vmatpush1.msra.mxu0 0.0
    %734 = vmatprep.subr.mxu0 0.0
    %735 = vmatpush1.msra.mxu0 0.0
    %736 = vmatprep.subr.mxu0 0.0
    %737 = vmatpush1.msra.mxu0 0.0
    %738 = vmatprep.subr.mxu0 0.0
    %739 = vmatpush1.msra.mxu0 0.0
    %740 = vmatprep.subr.mxu0 0.0
    %741 = vmatpush1.msra.mxu0 0.0
    %742 = vmatprep.subr.mxu0 0.0
    %743 = vmatpush1.msra.mxu0 0.0
    %744 = vmatprep.subr.mxu0 0.0
    %745 = vmatpush1.msra.mxu0 0.0
    %746 = vmatprep.subr.mxu0 0.0
    %747 = vmatpush1.msra.mxu0 0.0
    %748 = vmatprep.subr.mxu0 0.0
    %749 = vmatpush1.msra.mxu0 0.0
    %750 = vmatprep.mubr.f32.mxu0 0.0
    %751 = vmatmul.mubr.f32.gmra.mrb[0].mxu0 %v48
    %v752 = vpop.f32.mrb[0].mxu0
    %v753 = vadd.f32 %v684, %v752
    %v754 = vpop.f32.mrb[0].mxu0
    %755 = vmatprep.mubr.f32.mxu0 0.0
    %756 = vmatmul.mubr.f32.gmra.mrb[0].mxu0 %v51
    %v757 = vpop.f32.mrb[0].mxu0
    %v758 = vadd.f32 %v684, %v757
    %v759 = vpop.f32.mrb[0].mxu0
    %760 = vdwg.mxu0
    %v762 = vsel %vm304, %v577, 0
    %v765 = vsel %vm304, %v582, 0
    %v768 = vsel %vm304, %v665, 0
    %v771 = vsel %vm304, %v670, 0
    %773 = vmatprep.subr.mxu0 0.0
    %774 = vmatpush1.xpose.msra.mxu0 %v768
    %775 = vmatprep.subr.mxu0 0.0
    %776 = vmatpush1.xpose.msra.mxu0 %v771
    %777 = vmatprep.subr.mxu0 0.0
    %778 = vmatpush1.xpose.msra.mxu0 0.0
    %779 = vmatprep.subr.mxu0 0.0
    %780 = vmatpush1.xpose.msra.mxu0 0.0
    %781 = vmatprep.subr.mxu0 0.0
    %782 = vmatpush1.xpose.msra.mxu0 0.0
    %783 = vmatprep.subr.mxu0 0.0
    %784 = vmatpush1.xpose.msra.mxu0 0.0
    %785 = vmatprep.subr.mxu0 0.0
    %786 = vmatpush1.xpose.msra.mxu0 0.0
    %787 = vmatprep.subr.mxu0 0.0
    %788 = vmatpush1.xpose.msra.mxu0 0.0
    %789 = vmatprep.subr.mxu0 0.0
    %790 = vmatpush1.xpose.msra.mxu0 0.0
    %791 = vmatprep.subr.mxu0 0.0
    %792 = vmatpush1.xpose.msra.mxu0 0.0
    %793 = vmatprep.subr.mxu0 0.0
    %794 = vmatpush1.xpose.msra.mxu0 0.0
    %795 = vmatprep.subr.mxu0 0.0
    %796 = vmatpush1.xpose.msra.mxu0 0.0
    %797 = vmatprep.subr.mxu0 0.0
    %798 = vmatpush1.xpose.msra.mxu0 0.0
    %799 = vmatprep.subr.mxu0 0.0
    %800 = vmatpush1.xpose.msra.mxu0 0.0
    %801 = vmatprep.subr.mxu0 0.0
    %802 = vmatpush1.xpose.msra.mxu0 0.0
    %803 = vmatprep.subr.mxu0 0.0
    %804 = vmatpush1.xpose.msra.mxu0 0.0
    %805 = vmatprep.subr.mxu0 0.0
    %806 = vmatpush1.xpose.msra.mxu0 0.0
    %807 = vmatprep.subr.mxu0 0.0
    %808 = vmatpush1.xpose.msra.mxu0 0.0
    %809 = vmatprep.subr.mxu0 0.0
    %810 = vmatpush1.xpose.msra.mxu0 0.0
    %811 = vmatprep.subr.mxu0 0.0
    %812 = vmatpush1.xpose.msra.mxu0 0.0
    %813 = vmatprep.subr.mxu0 0.0
    %814 = vmatpush1.xpose.msra.mxu0 0.0
    %815 = vmatprep.subr.mxu0 0.0
    %816 = vmatpush1.xpose.msra.mxu0 0.0
    %817 = vmatprep.subr.mxu0 0.0
    %818 = vmatpush1.xpose.msra.mxu0 0.0
    %819 = vmatprep.subr.mxu0 0.0
    %820 = vmatpush1.xpose.msra.mxu0 0.0
    %821 = vmatprep.subr.mxu0 0.0
    %822 = vmatpush1.xpose.msra.mxu0 0.0
    %823 = vmatprep.subr.mxu0 0.0
    %824 = vmatpush1.xpose.msra.mxu0 0.0
    %825 = vmatprep.subr.mxu0 0.0
    %826 = vmatpush1.xpose.msra.mxu0 0.0
    %827 = vmatprep.subr.mxu0 0.0
    %828 = vmatpush1.xpose.msra.mxu0 0.0
    %829 = vmatprep.subr.mxu0 0.0
    %830 = vmatpush1.xpose.msra.mxu0 0.0
    %831 = vmatprep.subr.mxu0 0.0
    %832 = vmatpush1.xpose.msra.mxu0 0.0
    %833 = vmatprep.subr.mxu0 0.0
    %834 = vmatpush1.xpose.msra.mxu0 0.0
    %835 = vmatprep.subr.mxu0 0.0
    %836 = vmatpush1.xpose.msra.mxu0 0.0
    %837 = vmatprep.mubr.f32.mxu0 0.0
    %838 = vmatmul.mubr.f32.gmra.mrb[0].mxu0 %v762
    %v839 = vpop.f32.mrb[0].mxu0
    %v840 = vadd.f32 %v33, %v839
    %v841 = vpop.f32.mrb[0].mxu0
    %842 = vmatprep.mubr.f32.mxu0 0.0
    %843 = vmatmul.mubr.f32.gmra.mrb[0].mxu0 %v765
    %v844 = vpop.f32.mrb[0].mxu0
    %v845 = vadd.f32 %v34, %v844
    %v846 = vpop.f32.mrb[0].mxu0
    %847 = vdwg.mxu0
    %v848 = vsel %vm392, %v840, -inf
    %849 = vmax.xlane.f32.xlu0 %v848
    %v850 = vpop.xlane.xlu0 %849
    %v851 = vsel %vm392, %v845, -inf
    %852 = vmax.xlane.f32.xlu0 %v851
    %v853 = vpop.xlane.xlu0 %852
    %v854 = vsub.f32 %v840, %v850
    %v855 = vsub.f32 %v845, %v853
    %v856 = vmul.f32 %v854, 1.442695
    %v857 = vpow.pop %v856
    %v858 = vmul.f32 %v855, 1.442695
    %v859 = vpow.pop %v858
    %v860 = vsel %vm392, %v857, 0.0
    %861 = vadd.xlane.f32.xlu0 %v860
    %v862 = vpop.xlane.xlu0 %861
    %v863 = vsel %vm392, %v859, 0.0
    %864 = vadd.xlane.f32.xlu0 %v863
    %v865 = vpop.xlane.xlu0 %864
    %v866 = vrcp.pop %v862
    %v867 = vrcp.pop %v865
    %v869 = vsel %vm392, %v857, 0
    %v872 = vsel %vm392, %v859, 0
    %874 = vmatprep.subr.mxu0 0.0
    %875 = vmatpush1.msra.mxu0 %v753
    %876 = vmatprep.subr.mxu0 0.0
    %877 = vmatpush1.msra.mxu0 %v758
    %878 = vmatprep.subr.mxu0 0.0
    %879 = vmatpush1.msra.mxu0 0.0
    %880 = vmatprep.subr.mxu0 0.0
    %881 = vmatpush1.msra.mxu0 0.0
    %882 = vmatprep.subr.mxu0 0.0
    %883 = vmatpush1.msra.mxu0 0.0
    %884 = vmatprep.subr.mxu0 0.0
    %885 = vmatpush1.msra.mxu0 0.0
    %886 = vmatprep.subr.mxu0 0.0
    %887 = vmatpush1.msra.mxu0 0.0
    %888 = vmatprep.subr.mxu0 0.0
    %889 = vmatpush1.msra.mxu0 0.0
    %890 = vmatprep.subr.mxu0 0.0
    %891 = vmatpush1.msra.mxu0 0.0
    %892 = vmatprep.subr.mxu0 0.0
    %893 = vmatpush1.msra.mxu0 0.0
    %894 = vmatprep.subr.mxu0 0.0
    %895 = vmatpush1.msra.mxu0 0.0
    %896 = vmatprep.subr.mxu0 0.0
    %897 = vmatpush1.msra.mxu0 0.0
    %898 = vmatprep.subr.mxu0 0.0
    %899 = vmatpush1.msra.mxu0 0.0
    %900 = vmatprep.subr.mxu0 0.0
    %901 = vmatpush1.msra.mxu0 0.0
    %902 = vmatprep.subr.mxu0 0.0
    %903 = vmatpush1.msra.mxu0 0.0
    %904 = vmatprep.subr.mxu0 0.0
    %905 = vmatpush1.msra.mxu0 0.0
    %906 = vmatprep.subr.mxu0 0.0
    %907 = vmatpush1.msra.mxu0 0.0
    %908 = vmatprep.subr.mxu0 0.0
    %909 = vmatpush1.msra.mxu0 0.0
    %910 = vmatprep.subr.mxu0 0.0
    %911 = vmatpush1.msra.mxu0 0.0
    %912 = vmatprep.subr.mxu0 0.0
    %913 = vmatpush1.msra.mxu0 0.0
    %914 = vmatprep.subr.mxu0 0.0
    %915 = vmatpush1.msra.mxu0 0.0
    %916 = vmatprep.subr.mxu0 0.0
    %917 = vmatpush1.msra.mxu0 0.0
    %918 = vmatprep.subr.mxu0 0.0
    %919 = vmatpush1.msra.mxu0 0.0
    %920 = vmatprep.subr.mxu0 0.0
    %921 = vmatpush1.msra.mxu0 0.0
    %922 = vmatprep.subr.mxu0 0.0
    %923 = vmatpush1.msra.mxu0 0.0
    %924 = vmatprep.subr.mxu0 0.0
    %925 = vmatpush1.msra.mxu0 0.0
    %926 = vmatprep.subr.mxu0 0.0
    %927 = vmatpush1.msra.mxu0 0.0
    %928 = vmatprep.subr.mxu0 0.0
    %929 = vmatpush1.msra.mxu0 0.0
    %930 = vmatprep.subr.mxu0 0.0
    %931 = vmatpush1.msra.mxu0 0.0
    %932 = vmatprep.subr.mxu0 0.0
    %933 = vmatpush1.msra.mxu0 0.0
    %934 = vmatprep.subr.mxu0 0.0
    %935 = vmatpush1.msra.mxu0 0.0
    %936 = vmatprep.subr.mxu0 0.0
    %937 = vmatpush1.msra.mxu0 0.0
    %938 = vmatprep.mubr.f32.mxu0 0.0
    %939 = vmatmul.mubr.f32.gmra.mrb[0].mxu0 %v869
    %v940 = vpop.f32.mrb[0].mxu0
    %v941 = vadd.f32 0.0, %v940
    %v942 = vpop.f32.mrb[0].mxu0
    %943 = vmatprep.mubr.f32.mxu0 0.0
    %944 = vmatmul.mubr.f32.gmra.mrb[0].mxu0 %v872
    %v945 = vpop.f32.mrb[0].mxu0
    %v946 = vadd.f32 0.0, %v945
    %v947 = vpop.f32.mrb[0].mxu0
    %948 = vdwg.mxu0
    %v949 = vmul.f32 %v941, %v866
    %v950 = vmul.f32 %v946, %v867
    %s951 = scalar_lea.vmem %s3, 8
    %v952 = vld [vmem:[%s951] sm:$0xff]
    %v954 = vsel %vm304, %v949, 0
    %v957 = vsel %vm304, %v950, 0
    %959 = vmatprep.subr.mxu0 0.0
    %960 = vmatpush1.msra.mxu0 %v952
    %961 = vmatprep.subr.mxu0 0.0
    %962 = vmatpush1.msra.mxu0 0.0
    %963 = vmatprep.subr.mxu0 0.0
    %964 = vmatpush1.msra.mxu0 0.0
    %965 = vmatprep.subr.mxu0 0.0
    %966 = vmatpush1.msra.mxu0 0.0
    %967 = vmatprep.subr.mxu0 0.0
    %968 = vmatpush1.msra.mxu0 0.0
    %969 = vmatprep.subr.mxu0 0.0
    %970 = vmatpush1.msra.mxu0 0.0
    %971 = vmatprep.subr.mxu0 0.0
    %972 = vmatpush1.msra.mxu0 0.0
    %973 = vmatprep.subr.mxu0 0.0
    %974 = vmatpush1.msra.mxu0 0.0
    %975 = vmatprep.subr.mxu0 0.0
    %976 = vmatpush1.msra.mxu0 0.0
    %977 = vmatprep.subr.mxu0 0.0
    %978 = vmatpush1.msra.mxu0 0.0
    %979 = vmatprep.subr.mxu0 0.0
    %980 = vmatpush1.msra.mxu0 0.0
    %981 = vmatprep.subr.mxu0 0.0
    %982 = vmatpush1.msra.mxu0 0.0
    %983 = vmatprep.subr.mxu0 0.0
    %984 = vmatpush1.msra.mxu0 0.0
    %985 = vmatprep.subr.mxu0 0.0
    %986 = vmatpush1.msra.mxu0 0.0
    %987 = vmatprep.subr.mxu0 0.0
    %988 = vmatpush1.msra.mxu0 0.0
    %989 = vmatprep.subr.mxu0 0.0
    %990 = vmatpush1.msra.mxu0 0.0
    %991 = vmatprep.subr.mxu0 0.0
    %992 = vmatpush1.msra.mxu0 0.0
    %993 = vmatprep.subr.mxu0 0.0
    %994 = vmatpush1.msra.mxu0 0.0
    %995 = vmatprep.subr.mxu0 0.0
    %996 = vmatpush1.msra.mxu0 0.0
    %997 = vmatprep.subr.mxu0 0.0
    %998 = vmatpush1.msra.mxu0 0.0
    %999 = vmatprep.subr.mxu0 0.0
    %1000 = vmatpush1.msra.mxu0 0.0
    %1001 = vmatprep.subr.mxu0 0.0
    %1002 = vmatpush1.msra.mxu0 0.0
    %1003 = vmatprep.subr.mxu0 0.0
    %1004 = vmatpush1.msra.mxu0 0.0
    %1005 = vmatprep.subr.mxu0 0.0
    %1006 = vmatpush1.msra.mxu0 0.0
    %1007 = vmatprep.subr.mxu0 0.0
    %1008 = vmatpush1.msra.mxu0 0.0
    %1009 = vmatprep.subr.mxu0 0.0
    %1010 = vmatpush1.msra.mxu0 0.0
    %1011 = vmatprep.subr.mxu0 0.0
    %1012 = vmatpush1.msra.mxu0 0.0
    %1013 = vmatprep.subr.mxu0 0.0
    %1014 = vmatpush1.msra.mxu0 0.0
    %1015 = vmatprep.subr.mxu0 0.0
    %1016 = vmatpush1.msra.mxu0 0.0
    %1017 = vmatprep.subr.mxu0 0.0
    %1018 = vmatpush1.msra.mxu0 0.0
    %1019 = vmatprep.subr.mxu0 0.0
    %1020 = vmatpush1.msra.mxu0 0.0
    %1021 = vmatprep.subr.mxu0 0.0
    %1022 = vmatpush1.msra.mxu0 0.0
    %1023 = vmatprep.mubr.f32.mxu0 0.0
    %1024 = vmatmul.mubr.f32.gmra.mrb[0].mxu0 %v954
    %v1025 = vpop.f32.mrb[0].mxu0
    %v1026 = vadd.f32 0.0, %v1025
    %v1027 = vpop.f32.mrb[0].mxu0
    %1028 = vmatprep.mubr.f32.mxu0 0.0
    %1029 = vmatmul.mubr.f32.gmra.mrb[0].mxu0 %v957
    %v1030 = vpop.f32.mrb[0].mxu0
    %v1031 = vadd.f32 0.0, %v1030
    %v1032 = vpop.f32.mrb[0].mxu0
    %1033 = vdwg.mxu0
    %v1035 = vsel %vm304, %v494, 0
    %v1038 = vsel %vm304, %v495, 0
    %1040 = vmatprep.subr.mxu0 0.0
    %1041 = vmatpush1.msra.mxu0 %v496
    %1042 = vmatprep.subr.mxu0 0.0
    %1043 = vmatpush1.msra.mxu0 0.0
    %1044 = vmatprep.subr.mxu0 0.0
    %1045 = vmatpush1.msra.mxu0 0.0
    %1046 = vmatprep.subr.mxu0 0.0
    %1047 = vmatpush1.msra.mxu0 0.0
    %1048 = vmatprep.subr.mxu0 0.0
    %1049 = vmatpush1.msra.mxu0 0.0
    %1050 = vmatprep.subr.mxu0 0.0
    %1051 = vmatpush1.msra.mxu0 0.0
    %1052 = vmatprep.subr.mxu0 0.0
    %1053 = vmatpush1.msra.mxu0 0.0
    %1054 = vmatprep.subr.mxu0 0.0
    %1055 = vmatpush1.msra.mxu0 0.0
    %1056 = vmatprep.subr.mxu0 0.0
    %1057 = vmatpush1.msra.mxu0 0.0
    %1058 = vmatprep.subr.mxu0 0.0
    %1059 = vmatpush1.msra.mxu0 0.0
    %1060 = vmatprep.subr.mxu0 0.0
    %1061 = vmatpush1.msra.mxu0 0.0
    %1062 = vmatprep.subr.mxu0 0.0
    %1063 = vmatpush1.msra.mxu0 0.0
    %1064 = vmatprep.subr.mxu0 0.0
    %1065 = vmatpush1.msra.mxu0 0.0
    %1066 = vmatprep.subr.mxu0 0.0
    %1067 = vmatpush1.msra.mxu0 0.0
    %1068 = vmatprep.subr.mxu0 0.0
    %1069 = vmatpush1.msra.mxu0 0.0
    %1070 = vmatprep.subr.mxu0 0.0
    %1071 = vmatpush1.msra.mxu0 0.0
    %1072 = vmatprep.subr.mxu0 0.0
    %1073 = vmatpush1.msra.mxu0 0.0
    %1074 = vmatprep.subr.mxu0 0.0
    %1075 = vmatpush1.msra.mxu0 0.0
    %1076 = vmatprep.subr.mxu0 0.0
    %1077 = vmatpush1.msra.mxu0 0.0
    %1078 = vmatprep.subr.mxu0 0.0
    %1079 = vmatpush1.msra.mxu0 0.0
    %1080 = vmatprep.subr.mxu0 0.0
    %1081 = vmatpush1.msra.mxu0 0.0
    %1082 = vmatprep.subr.mxu0 0.0
    %1083 = vmatpush1.msra.mxu0 0.0
    %1084 = vmatprep.subr.mxu0 0.0
    %1085 = vmatpush1.msra.mxu0 0.0
    %1086 = vmatprep.subr.mxu0 0.0
    %1087 = vmatpush1.msra.mxu0 0.0
    %1088 = vmatprep.subr.mxu0 0.0
    %1089 = vmatpush1.msra.mxu0 0.0
    %1090 = vmatprep.subr.mxu0 0.0
    %1091 = vmatpush1.msra.mxu0 0.0
    %1092 = vmatprep.subr.mxu0 0.0
    %1093 = vmatpush1.msra.mxu0 0.0
    %1094 = vmatprep.subr.mxu0 0.0
    %1095 = vmatpush1.msra.mxu0 0.0
    %1096 = vmatprep.subr.mxu0 0.0
    %1097 = vmatpush1.msra.mxu0 0.0
    %1098 = vmatprep.subr.mxu0 0.0
    %1099 = vmatpush1.msra.mxu0 0.0
    %1100 = vmatprep.subr.mxu0 0.0
    %1101 = vmatpush1.msra.mxu0 0.0
    %1102 = vmatprep.subr.mxu0 0.0
    %1103 = vmatpush1.msra.mxu0 0.0
    %1104 = vmatprep.mubr.f32.mxu0 0.0
    %1105 = vmatmul.mubr.f32.gmra.mrb[0].mxu0 %v1035
    %v1106 = vpop.f32.mrb[0].mxu0
    %v1107 = vadd.f32 %v1026, %v1106
    %v1108 = vpop.f32.mrb[0].mxu0
    %1109 = vmatprep.mubr.f32.mxu0 0.0
    %1110 = vmatmul.mubr.f32.gmra.mrb[0].mxu0 %v1038
    %v1111 = vpop.f32.mrb[0].mxu0
    %v1112 = vadd.f32 %v1031, %v1111
    %v1113 = vpop.f32.mrb[0].mxu0
    %1114 = vdwg.mxu0
    %s1115 = scalar_lea.vmem %s1, 64
    %v1116 = vld [vmem:[%s1115] sm:$0xff]
    %v1117 = vld [vmem:[%s1115 + $0x8] sm:$0xff]
    %v1118 = vld [vmem:[%s1115 + $0x10] sm:$0xff]
    %v1119 = vld [vmem:[%s1115 + $0x18] sm:$0xff]
    %s1120 = scalar_lea.vmem %s2, 2
    %v1121 = vld [vmem:[%s1120] sm:$0x1]
    %v1123 = vlaneseq
    %v1124 = vshrl.u32 %v1123, 7
    %v1125 = vsub.s32 0, %v1124
    %v1126 = vrot.slane %v1121, %v1125
    %1128 = vmatprep.subr.mxu0 0.0
    %1129 = vmatpush1.msra.mxu0 %v1116
    %1130 = vmatprep.subr.mxu0 0.0
    %1131 = vmatpush1.msra.mxu0 %v1117
    %1132 = vmatprep.subr.mxu0 0.0
    %1133 = vmatpush1.msra.mxu0 %v1118
    %1134 = vmatprep.subr.mxu0 0.0
    %1135 = vmatpush1.msra.mxu0 %v1119
    %1136 = vmatprep.subr.mxu0 0.0
    %1137 = vmatpush1.msra.mxu0 0.0
    %1138 = vmatprep.subr.mxu0 0.0
    %1139 = vmatpush1.msra.mxu0 0.0
    %1140 = vmatprep.subr.mxu0 0.0
    %1141 = vmatpush1.msra.mxu0 0.0
    %1142 = vmatprep.subr.mxu0 0.0
    %1143 = vmatpush1.msra.mxu0 0.0
    %1144 = vmatprep.subr.mxu0 0.0
    %1145 = vmatpush1.msra.mxu0 0.0
    %1146 = vmatprep.subr.mxu0 0.0
    %1147 = vmatpush1.msra.mxu0 0.0
    %1148 = vmatprep.subr.mxu0 0.0
    %1149 = vmatpush1.msra.mxu0 0.0
    %1150 = vmatprep.subr.mxu0 0.0
    %1151 = vmatpush1.msra.mxu0 0.0
    %1152 = vmatprep.subr.mxu0 0.0
    %1153 = vmatpush1.msra.mxu0 0.0
    %1154 = vmatprep.subr.mxu0 0.0
    %1155 = vmatpush1.msra.mxu0 0.0
    %1156 = vmatprep.subr.mxu0 0.0
    %1157 = vmatpush1.msra.mxu0 0.0
    %1158 = vmatprep.subr.mxu0 0.0
    %1159 = vmatpush1.msra.mxu0 0.0
    %1160 = vmatprep.subr.mxu0 0.0
    %1161 = vmatpush1.msra.mxu0 0.0
    %1162 = vmatprep.subr.mxu0 0.0
    %1163 = vmatpush1.msra.mxu0 0.0
    %1164 = vmatprep.subr.mxu0 0.0
    %1165 = vmatpush1.msra.mxu0 0.0
    %1166 = vmatprep.subr.mxu0 0.0
    %1167 = vmatpush1.msra.mxu0 0.0
    %1168 = vmatprep.subr.mxu0 0.0
    %1169 = vmatpush1.msra.mxu0 0.0
    %1170 = vmatprep.subr.mxu0 0.0
    %1171 = vmatpush1.msra.mxu0 0.0
    %1172 = vmatprep.subr.mxu0 0.0
    %1173 = vmatpush1.msra.mxu0 0.0
    %1174 = vmatprep.subr.mxu0 0.0
    %1175 = vmatpush1.msra.mxu0 0.0
    %1176 = vmatprep.subr.mxu0 0.0
    %1177 = vmatpush1.msra.mxu0 0.0
    %1178 = vmatprep.subr.mxu0 0.0
    %1179 = vmatpush1.msra.mxu0 0.0
    %1180 = vmatprep.subr.mxu0 0.0
    %1181 = vmatpush1.msra.mxu0 0.0
    %1182 = vmatprep.subr.mxu0 0.0
    %1183 = vmatpush1.msra.mxu0 0.0
    %1184 = vmatprep.subr.mxu0 0.0
    %1185 = vmatpush1.msra.mxu0 0.0
    %1186 = vmatprep.subr.mxu0 0.0
    %1187 = vmatpush1.msra.mxu0 0.0
    %1188 = vmatprep.subr.mxu0 0.0
    %1189 = vmatpush1.msra.mxu0 0.0
    %1190 = vmatprep.subr.mxu0 0.0
    %1191 = vmatpush1.msra.mxu0 0.0
    %1192 = vmatprep.mubr.f32.mxu0 0.0
    %1193 = vmatmul.mubr.f32.gmra.mrb[0].mxu0 %v48
    %v1194 = vpop.f32.mrb[0].mxu0
    %v1195 = vadd.f32 %v1126, %v1194
    %v1196 = vpop.f32.mrb[0].mxu0
    %1197 = vmatprep.mubr.f32.mxu0 0.0
    %1198 = vmatmul.mubr.f32.gmra.mrb[0].mxu0 %v51
    %v1199 = vpop.f32.mrb[0].mxu0
    %v1200 = vadd.f32 %v1126, %v1199
    %v1201 = vpop.f32.mrb[0].mxu0
    %1202 = vdwg.mxu0
    %s1203 = scalar_lea.vmem %s1, 192
    %v1204 = vld [vmem:[%s1203] sm:$0xff]
    %v1205 = vld [vmem:[%s1203 + $0x8] sm:$0xff]
    %v1206 = vld [vmem:[%s1203 + $0x10] sm:$0xff]
    %v1207 = vld [vmem:[%s1203 + $0x18] sm:$0xff]
    %s1208 = scalar_lea.vmem %s2, 6
    %v1209 = vld [vmem:[%s1208] sm:$0x1]
    %v1211 = vlaneseq
    %v1212 = vshrl.u32 %v1211, 7
    %v1213 = vsub.s32 0, %v1212
    %v1214 = vrot.slane %v1209, %v1213
    %1216 = vmatprep.subr.mxu0 0.0
    %1217 = vmatpush1.msra.mxu0 %v1204
    %1218 = vmatprep.subr.mxu0 0.0
    %1219 = vmatpush1.msra.mxu0 %v1205
    %1220 = vmatprep.subr.mxu0 0.0
    %1221 = vmatpush1.msra.mxu0 %v1206
    %1222 = vmatprep.subr.mxu0 0.0
    %1223 = vmatpush1.msra.mxu0 %v1207
    %1224 = vmatprep.subr.mxu0 0.0
    %1225 = vmatpush1.msra.mxu0 0.0
    %1226 = vmatprep.subr.mxu0 0.0
    %1227 = vmatpush1.msra.mxu0 0.0
    %1228 = vmatprep.subr.mxu0 0.0
    %1229 = vmatpush1.msra.mxu0 0.0
    %1230 = vmatprep.subr.mxu0 0.0
    %1231 = vmatpush1.msra.mxu0 0.0
    %1232 = vmatprep.subr.mxu0 0.0
    %1233 = vmatpush1.msra.mxu0 0.0
    %1234 = vmatprep.subr.mxu0 0.0
    %1235 = vmatpush1.msra.mxu0 0.0
    %1236 = vmatprep.subr.mxu0 0.0
    %1237 = vmatpush1.msra.mxu0 0.0
    %1238 = vmatprep.subr.mxu0 0.0
    %1239 = vmatpush1.msra.mxu0 0.0
    %1240 = vmatprep.subr.mxu0 0.0
    %1241 = vmatpush1.msra.mxu0 0.0
    %1242 = vmatprep.subr.mxu0 0.0
    %1243 = vmatpush1.msra.mxu0 0.0
    %1244 = vmatprep.subr.mxu0 0.0
    %1245 = vmatpush1.msra.mxu0 0.0
    %1246 = vmatprep.subr.mxu0 0.0
    %1247 = vmatpush1.msra.mxu0 0.0
    %1248 = vmatprep.subr.mxu0 0.0
    %1249 = vmatpush1.msra.mxu0 0.0
    %1250 = vmatprep.subr.mxu0 0.0
    %1251 = vmatpush1.msra.mxu0 0.0
    %1252 = vmatprep.subr.mxu0 0.0
    %1253 = vmatpush1.msra.mxu0 0.0
    %1254 = vmatprep.subr.mxu0 0.0
    %1255 = vmatpush1.msra.mxu0 0.0
    %1256 = vmatprep.subr.mxu0 0.0
    %1257 = vmatpush1.msra.mxu0 0.0
    %1258 = vmatprep.subr.mxu0 0.0
    %1259 = vmatpush1.msra.mxu0 0.0
    %1260 = vmatprep.subr.mxu0 0.0
    %1261 = vmatpush1.msra.mxu0 0.0
    %1262 = vmatprep.subr.mxu0 0.0
    %1263 = vmatpush1.msra.mxu0 0.0
    %1264 = vmatprep.subr.mxu0 0.0
    %1265 = vmatpush1.msra.mxu0 0.0
    %1266 = vmatprep.subr.mxu0 0.0
    %1267 = vmatpush1.msra.mxu0 0.0
    %1268 = vmatprep.subr.mxu0 0.0
    %1269 = vmatpush1.msra.mxu0 0.0
    %1270 = vmatprep.subr.mxu0 0.0
    %1271 = vmatpush1.msra.mxu0 0.0
    %1272 = vmatprep.subr.mxu0 0.0
    %1273 = vmatpush1.msra.mxu0 0.0
    %1274 = vmatprep.subr.mxu0 0.0
    %1275 = vmatpush1.msra.mxu0 0.0
    %1276 = vmatprep.subr.mxu0 0.0
    %1277 = vmatpush1.msra.mxu0 0.0
    %1278 = vmatprep.subr.mxu0 0.0
    %1279 = vmatpush1.msra.mxu0 0.0
    %1280 = vmatprep.mubr.f32.mxu0 0.0
    %1281 = vmatmul.mubr.f32.gmra.mrb[0].mxu0 %v48
    %v1282 = vpop.f32.mrb[0].mxu0
    %v1283 = vadd.f32 %v1214, %v1282
    %v1284 = vpop.f32.mrb[0].mxu0
    %1285 = vmatprep.mubr.f32.mxu0 0.0
    %1286 = vmatmul.mubr.f32.gmra.mrb[0].mxu0 %v51
    %v1287 = vpop.f32.mrb[0].mxu0
    %v1288 = vadd.f32 %v1214, %v1287
    %v1289 = vpop.f32.mrb[0].mxu0
    %1290 = vdwg.mxu0
    %s1291 = scalar_lea.vmem %s1, 320
    %v1292 = vld [vmem:[%s1291] sm:$0xff]
    %v1293 = vld [vmem:[%s1291 + $0x8] sm:$0xff]
    %v1294 = vld [vmem:[%s1291 + $0x10] sm:$0xff]
    %v1295 = vld [vmem:[%s1291 + $0x18] sm:$0xff]
    %s1296 = scalar_lea.vmem %s2, 10
    %v1297 = vld [vmem:[%s1296] sm:$0x1]
    %v1299 = vlaneseq
    %v1300 = vshrl.u32 %v1299, 7
    %v1301 = vsub.s32 0, %v1300
    %v1302 = vrot.slane %v1297, %v1301
    %1304 = vmatprep.subr.mxu0 0.0
    %1305 = vmatpush1.msra.mxu0 %v1292
    %1306 = vmatprep.subr.mxu0 0.0
    %1307 = vmatpush1.msra.mxu0 %v1293
    %1308 = vmatprep.subr.mxu0 0.0
    %1309 = vmatpush1.msra.mxu0 %v1294
    %1310 = vmatprep.subr.mxu0 0.0
    %1311 = vmatpush1.msra.mxu0 %v1295
    %1312 = vmatprep.subr.mxu0 0.0
    %1313 = vmatpush1.msra.mxu0 0.0
    %1314 = vmatprep.subr.mxu0 0.0
    %1315 = vmatpush1.msra.mxu0 0.0
    %1316 = vmatprep.subr.mxu0 0.0
    %1317 = vmatpush1.msra.mxu0 0.0
    %1318 = vmatprep.subr.mxu0 0.0
    %1319 = vmatpush1.msra.mxu0 0.0
    %1320 = vmatprep.subr.mxu0 0.0
    %1321 = vmatpush1.msra.mxu0 0.0
    %1322 = vmatprep.subr.mxu0 0.0
    %1323 = vmatpush1.msra.mxu0 0.0
    %1324 = vmatprep.subr.mxu0 0.0
    %1325 = vmatpush1.msra.mxu0 0.0
    %1326 = vmatprep.subr.mxu0 0.0
    %1327 = vmatpush1.msra.mxu0 0.0
    %1328 = vmatprep.subr.mxu0 0.0
    %1329 = vmatpush1.msra.mxu0 0.0
    %1330 = vmatprep.subr.mxu0 0.0
    %1331 = vmatpush1.msra.mxu0 0.0
    %1332 = vmatprep.subr.mxu0 0.0
    %1333 = vmatpush1.msra.mxu0 0.0
    %1334 = vmatprep.subr.mxu0 0.0
    %1335 = vmatpush1.msra.mxu0 0.0
    %1336 = vmatprep.subr.mxu0 0.0
    %1337 = vmatpush1.msra.mxu0 0.0
    %1338 = vmatprep.subr.mxu0 0.0
    %1339 = vmatpush1.msra.mxu0 0.0
    %1340 = vmatprep.subr.mxu0 0.0
    %1341 = vmatpush1.msra.mxu0 0.0
    %1342 = vmatprep.subr.mxu0 0.0
    %1343 = vmatpush1.msra.mxu0 0.0
    %1344 = vmatprep.subr.mxu0 0.0
    %1345 = vmatpush1.msra.mxu0 0.0
    %1346 = vmatprep.subr.mxu0 0.0
    %1347 = vmatpush1.msra.mxu0 0.0
    %1348 = vmatprep.subr.mxu0 0.0
    %1349 = vmatpush1.msra.mxu0 0.0
    %1350 = vmatprep.subr.mxu0 0.0
    %1351 = vmatpush1.msra.mxu0 0.0
    %1352 = vmatprep.subr.mxu0 0.0
    %1353 = vmatpush1.msra.mxu0 0.0
    %1354 = vmatprep.subr.mxu0 0.0
    %1355 = vmatpush1.msra.mxu0 0.0
    %1356 = vmatprep.subr.mxu0 0.0
    %1357 = vmatpush1.msra.mxu0 0.0
    %1358 = vmatprep.subr.mxu0 0.0
    %1359 = vmatpush1.msra.mxu0 0.0
    %1360 = vmatprep.subr.mxu0 0.0
    %1361 = vmatpush1.msra.mxu0 0.0
    %1362 = vmatprep.subr.mxu0 0.0
    %1363 = vmatpush1.msra.mxu0 0.0
    %1364 = vmatprep.subr.mxu0 0.0
    %1365 = vmatpush1.msra.mxu0 0.0
    %1366 = vmatprep.subr.mxu0 0.0
    %1367 = vmatpush1.msra.mxu0 0.0
    %1368 = vmatprep.mubr.f32.mxu0 0.0
    %1369 = vmatmul.mubr.f32.gmra.mrb[0].mxu0 %v48
    %v1370 = vpop.f32.mrb[0].mxu0
    %v1371 = vadd.f32 %v1302, %v1370
    %v1372 = vpop.f32.mrb[0].mxu0
    %1373 = vmatprep.mubr.f32.mxu0 0.0
    %1374 = vmatmul.mubr.f32.gmra.mrb[0].mxu0 %v51
    %v1375 = vpop.f32.mrb[0].mxu0
    %v1376 = vadd.f32 %v1302, %v1375
    %v1377 = vpop.f32.mrb[0].mxu0
    %1378 = vdwg.mxu0
    %v1380 = vsel %vm304, %v1195, 0
    %v1383 = vsel %vm304, %v1200, 0
    %v1386 = vsel %vm304, %v1283, 0
    %v1389 = vsel %vm304, %v1288, 0
    %1391 = vmatprep.subr.mxu0 0.0
    %1392 = vmatpush1.xpose.msra.mxu0 %v1386
    %1393 = vmatprep.subr.mxu0 0.0
    %1394 = vmatpush1.xpose.msra.mxu0 %v1389
    %1395 = vmatprep.subr.mxu0 0.0
    %1396 = vmatpush1.xpose.msra.mxu0 0.0
    %1397 = vmatprep.subr.mxu0 0.0
    %1398 = vmatpush1.xpose.msra.mxu0 0.0
    %1399 = vmatprep.subr.mxu0 0.0
    %1400 = vmatpush1.xpose.msra.mxu0 0.0
    %1401 = vmatprep.subr.mxu0 0.0
    %1402 = vmatpush1.xpose.msra.mxu0 0.0
    %1403 = vmatprep.subr.mxu0 0.0
    %1404 = vmatpush1.xpose.msra.mxu0 0.0
    %1405 = vmatprep.subr.mxu0 0.0
    %1406 = vmatpush1.xpose.msra.mxu0 0.0
    %1407 = vmatprep.subr.mxu0 0.0
    %1408 = vmatpush1.xpose.msra.mxu0 0.0
    %1409 = vmatprep.subr.mxu0 0.0
    %1410 = vmatpush1.xpose.msra.mxu0 0.0
    %1411 = vmatprep.subr.mxu0 0.0
    %1412 = vmatpush1.xpose.msra.mxu0 0.0
    %1413 = vmatprep.subr.mxu0 0.0
    %1414 = vmatpush1.xpose.msra.mxu0 0.0
    %1415 = vmatprep.subr.mxu0 0.0
    %1416 = vmatpush1.xpose.msra.mxu0 0.0
    %1417 = vmatprep.subr.mxu0 0.0
    %1418 = vmatpush1.xpose.msra.mxu0 0.0
    %1419 = vmatprep.subr.mxu0 0.0
    %1420 = vmatpush1.xpose.msra.mxu0 0.0
    %1421 = vmatprep.subr.mxu0 0.0
    %1422 = vmatpush1.xpose.msra.mxu0 0.0
    %1423 = vmatprep.subr.mxu0 0.0
    %1424 = vmatpush1.xpose.msra.mxu0 0.0
    %1425 = vmatprep.subr.mxu0 0.0
    %1426 = vmatpush1.xpose.msra.mxu0 0.0
    %1427 = vmatprep.subr.mxu0 0.0
    %1428 = vmatpush1.xpose.msra.mxu0 0.0
    %1429 = vmatprep.subr.mxu0 0.0
    %1430 = vmatpush1.xpose.msra.mxu0 0.0
    %1431 = vmatprep.subr.mxu0 0.0
    %1432 = vmatpush1.xpose.msra.mxu0 0.0
    %1433 = vmatprep.subr.mxu0 0.0
    %1434 = vmatpush1.xpose.msra.mxu0 0.0
    %1435 = vmatprep.subr.mxu0 0.0
    %1436 = vmatpush1.xpose.msra.mxu0 0.0
    %1437 = vmatprep.subr.mxu0 0.0
    %1438 = vmatpush1.xpose.msra.mxu0 0.0
    %1439 = vmatprep.subr.mxu0 0.0
    %1440 = vmatpush1.xpose.msra.mxu0 0.0
    %1441 = vmatprep.subr.mxu0 0.0
    %1442 = vmatpush1.xpose.msra.mxu0 0.0
    %1443 = vmatprep.subr.mxu0 0.0
    %1444 = vmatpush1.xpose.msra.mxu0 0.0
    %1445 = vmatprep.subr.mxu0 0.0
    %1446 = vmatpush1.xpose.msra.mxu0 0.0
    %1447 = vmatprep.subr.mxu0 0.0
    %1448 = vmatpush1.xpose.msra.mxu0 0.0
    %1449 = vmatprep.subr.mxu0 0.0
    %1450 = vmatpush1.xpose.msra.mxu0 0.0
    %1451 = vmatprep.subr.mxu0 0.0
    %1452 = vmatpush1.xpose.msra.mxu0 0.0
    %1453 = vmatprep.subr.mxu0 0.0
    %1454 = vmatpush1.xpose.msra.mxu0 0.0
    %1455 = vmatprep.mubr.f32.mxu0 0.0
    %1456 = vmatmul.mubr.f32.gmra.mrb[0].mxu0 %v1380
    %v1457 = vpop.f32.mrb[0].mxu0
    %v1458 = vadd.f32 %v33, %v1457
    %v1459 = vpop.f32.mrb[0].mxu0
    %1460 = vmatprep.mubr.f32.mxu0 0.0
    %1461 = vmatmul.mubr.f32.gmra.mrb[0].mxu0 %v1383
    %v1462 = vpop.f32.mrb[0].mxu0
    %v1463 = vadd.f32 %v34, %v1462
    %v1464 = vpop.f32.mrb[0].mxu0
    %1465 = vdwg.mxu0
    %v1466 = vsel %vm392, %v1458, -inf
    %1467 = vmax.xlane.f32.xlu0 %v1466
    %v1468 = vpop.xlane.xlu0 %1467
    %v1469 = vsel %vm392, %v1463, -inf
    %1470 = vmax.xlane.f32.xlu0 %v1469
    %v1471 = vpop.xlane.xlu0 %1470
    %v1472 = vsub.f32 %v1458, %v1468
    %v1473 = vsub.f32 %v1463, %v1471
    %v1474 = vmul.f32 %v1472, 1.442695
    %v1475 = vpow.pop %v1474
    %v1476 = vmul.f32 %v1473, 1.442695
    %v1477 = vpow.pop %v1476
    %v1478 = vsel %vm392, %v1475, 0.0
    %1479 = vadd.xlane.f32.xlu0 %v1478
    %v1480 = vpop.xlane.xlu0 %1479
    %v1481 = vsel %vm392, %v1477, 0.0
    %1482 = vadd.xlane.f32.xlu0 %v1481
    %v1483 = vpop.xlane.xlu0 %1482
    %v1484 = vrcp.pop %v1480
    %v1485 = vrcp.pop %v1483
    %v1487 = vsel %vm392, %v1475, 0
    %v1490 = vsel %vm392, %v1477, 0
    %1492 = vmatprep.subr.mxu0 0.0
    %1493 = vmatpush1.msra.mxu0 %v1371
    %1494 = vmatprep.subr.mxu0 0.0
    %1495 = vmatpush1.msra.mxu0 %v1376
    %1496 = vmatprep.subr.mxu0 0.0
    %1497 = vmatpush1.msra.mxu0 0.0
    %1498 = vmatprep.subr.mxu0 0.0
    %1499 = vmatpush1.msra.mxu0 0.0
    %1500 = vmatprep.subr.mxu0 0.0
    %1501 = vmatpush1.msra.mxu0 0.0
    %1502 = vmatprep.subr.mxu0 0.0
    %1503 = vmatpush1.msra.mxu0 0.0
    %1504 = vmatprep.subr.mxu0 0.0
    %1505 = vmatpush1.msra.mxu0 0.0
    %1506 = vmatprep.subr.mxu0 0.0
    %1507 = vmatpush1.msra.mxu0 0.0
    %1508 = vmatprep.subr.mxu0 0.0
    %1509 = vmatpush1.msra.mxu0 0.0
    %1510 = vmatprep.subr.mxu0 0.0
    %1511 = vmatpush1.msra.mxu0 0.0
    %1512 = vmatprep.subr.mxu0 0.0
    %1513 = vmatpush1.msra.mxu0 0.0
    %1514 = vmatprep.subr.mxu0 0.0
    %1515 = vmatpush1.msra.mxu0 0.0
    %1516 = vmatprep.subr.mxu0 0.0
    %1517 = vmatpush1.msra.mxu0 0.0
    %1518 = vmatprep.subr.mxu0 0.0
    %1519 = vmatpush1.msra.mxu0 0.0
    %1520 = vmatprep.subr.mxu0 0.0
    %1521 = vmatpush1.msra.mxu0 0.0
    %1522 = vmatprep.subr.mxu0 0.0
    %1523 = vmatpush1.msra.mxu0 0.0
    %1524 = vmatprep.subr.mxu0 0.0
    %1525 = vmatpush1.msra.mxu0 0.0
    %1526 = vmatprep.subr.mxu0 0.0
    %1527 = vmatpush1.msra.mxu0 0.0
    %1528 = vmatprep.subr.mxu0 0.0
    %1529 = vmatpush1.msra.mxu0 0.0
    %1530 = vmatprep.subr.mxu0 0.0
    %1531 = vmatpush1.msra.mxu0 0.0
    %1532 = vmatprep.subr.mxu0 0.0
    %1533 = vmatpush1.msra.mxu0 0.0
    %1534 = vmatprep.subr.mxu0 0.0
    %1535 = vmatpush1.msra.mxu0 0.0
    %1536 = vmatprep.subr.mxu0 0.0
    %1537 = vmatpush1.msra.mxu0 0.0
    %1538 = vmatprep.subr.mxu0 0.0
    %1539 = vmatpush1.msra.mxu0 0.0
    %1540 = vmatprep.subr.mxu0 0.0
    %1541 = vmatpush1.msra.mxu0 0.0
    %1542 = vmatprep.subr.mxu0 0.0
    %1543 = vmatpush1.msra.mxu0 0.0
    %1544 = vmatprep.subr.mxu0 0.0
    %1545 = vmatpush1.msra.mxu0 0.0
    %1546 = vmatprep.subr.mxu0 0.0
    %1547 = vmatpush1.msra.mxu0 0.0
    %1548 = vmatprep.subr.mxu0 0.0
    %1549 = vmatpush1.msra.mxu0 0.0
    %1550 = vmatprep.subr.mxu0 0.0
    %1551 = vmatpush1.msra.mxu0 0.0
    %1552 = vmatprep.subr.mxu0 0.0
    %1553 = vmatpush1.msra.mxu0 0.0
    %1554 = vmatprep.subr.mxu0 0.0
    %1555 = vmatpush1.msra.mxu0 0.0
    %1556 = vmatprep.mubr.f32.mxu0 0.0
    %1557 = vmatmul.mubr.f32.gmra.mrb[0].mxu0 %v1487
    %v1558 = vpop.f32.mrb[0].mxu0
    %v1559 = vadd.f32 0.0, %v1558
    %v1560 = vpop.f32.mrb[0].mxu0
    %1561 = vmatprep.mubr.f32.mxu0 0.0
    %1562 = vmatmul.mubr.f32.gmra.mrb[0].mxu0 %v1490
    %v1563 = vpop.f32.mrb[0].mxu0
    %v1564 = vadd.f32 0.0, %v1563
    %v1565 = vpop.f32.mrb[0].mxu0
    %1566 = vdwg.mxu0
    %v1567 = vmul.f32 %v1559, %v1484
    %v1568 = vmul.f32 %v1564, %v1485
    %s1569 = scalar_lea.vmem %s3, 16
    %v1570 = vld [vmem:[%s1569] sm:$0xff]
    %v1572 = vsel %vm304, %v1567, 0
    %v1575 = vsel %vm304, %v1568, 0
    %1577 = vmatprep.subr.mxu0 0.0
    %1578 = vmatpush1.msra.mxu0 %v1570
    %1579 = vmatprep.subr.mxu0 0.0
    %1580 = vmatpush1.msra.mxu0 0.0
    %1581 = vmatprep.subr.mxu0 0.0
    %1582 = vmatpush1.msra.mxu0 0.0
    %1583 = vmatprep.subr.mxu0 0.0
    %1584 = vmatpush1.msra.mxu0 0.0
    %1585 = vmatprep.subr.mxu0 0.0
    %1586 = vmatpush1.msra.mxu0 0.0
    %1587 = vmatprep.subr.mxu0 0.0
    %1588 = vmatpush1.msra.mxu0 0.0
    %1589 = vmatprep.subr.mxu0 0.0
    %1590 = vmatpush1.msra.mxu0 0.0
    %1591 = vmatprep.subr.mxu0 0.0
    %1592 = vmatpush1.msra.mxu0 0.0
    %1593 = vmatprep.subr.mxu0 0.0
    %1594 = vmatpush1.msra.mxu0 0.0
    %1595 = vmatprep.subr.mxu0 0.0
    %1596 = vmatpush1.msra.mxu0 0.0
    %1597 = vmatprep.subr.mxu0 0.0
    %1598 = vmatpush1.msra.mxu0 0.0
    %1599 = vmatprep.subr.mxu0 0.0
    %1600 = vmatpush1.msra.mxu0 0.0
    %1601 = vmatprep.subr.mxu0 0.0
    %1602 = vmatpush1.msra.mxu0 0.0
    %1603 = vmatprep.subr.mxu0 0.0
    %1604 = vmatpush1.msra.mxu0 0.0
    %1605 = vmatprep.subr.mxu0 0.0
    %1606 = vmatpush1.msra.mxu0 0.0
    %1607 = vmatprep.subr.mxu0 0.0
    %1608 = vmatpush1.msra.mxu0 0.0
    %1609 = vmatprep.subr.mxu0 0.0
    %1610 = vmatpush1.msra.mxu0 0.0
    %1611 = vmatprep.subr.mxu0 0.0
    %1612 = vmatpush1.msra.mxu0 0.0
    %1613 = vmatprep.subr.mxu0 0.0
    %1614 = vmatpush1.msra.mxu0 0.0
    %1615 = vmatprep.subr.mxu0 0.0
    %1616 = vmatpush1.msra.mxu0 0.0
    %1617 = vmatprep.subr.mxu0 0.0
    %1618 = vmatpush1.msra.mxu0 0.0
    %1619 = vmatprep.subr.mxu0 0.0
    %1620 = vmatpush1.msra.mxu0 0.0
    %1621 = vmatprep.subr.mxu0 0.0
    %1622 = vmatpush1.msra.mxu0 0.0
    %1623 = vmatprep.subr.mxu0 0.0
    %1624 = vmatpush1.msra.mxu0 0.0
    %1625 = vmatprep.subr.mxu0 0.0
    %1626 = vmatpush1.msra.mxu0 0.0
    %1627 = vmatprep.subr.mxu0 0.0
    %1628 = vmatpush1.msra.mxu0 0.0
    %1629 = vmatprep.subr.mxu0 0.0
    %1630 = vmatpush1.msra.mxu0 0.0
    %1631 = vmatprep.subr.mxu0 0.0
    %1632 = vmatpush1.msra.mxu0 0.0
    %1633 = vmatprep.subr.mxu0 0.0
    %1634 = vmatpush1.msra.mxu0 0.0
    %1635 = vmatprep.subr.mxu0 0.0
    %1636 = vmatpush1.msra.mxu0 0.0
    %1637 = vmatprep.subr.mxu0 0.0
    %1638 = vmatpush1.msra.mxu0 0.0
    %1639 = vmatprep.subr.mxu0 0.0
    %1640 = vmatpush1.msra.mxu0 0.0
    %1641 = vmatprep.mubr.f32.mxu0 0.0
    %1642 = vmatmul.mubr.f32.gmra.mrb[0].mxu0 %v1572
    %v1643 = vpop.f32.mrb[0].mxu0
    %v1644 = vadd.f32 0.0, %v1643
    %v1645 = vpop.f32.mrb[0].mxu0
    %1646 = vmatprep.mubr.f32.mxu0 0.0
    %1647 = vmatmul.mubr.f32.gmra.mrb[0].mxu0 %v1575
    %v1648 = vpop.f32.mrb[0].mxu0
    %v1649 = vadd.f32 0.0, %v1648
    %v1650 = vpop.f32.mrb[0].mxu0
    %1651 = vdwg.mxu0
    %v1652 = vadd.f32 %v1107, %v1644
    %v1653 = vadd.f32 %v1112, %v1649
    %s1654 = scalar_lea.vmem %s1, 96
    %v1655 = vld [vmem:[%s1654] sm:$0xff]
    %v1656 = vld [vmem:[%s1654 + $0x8] sm:$0xff]
    %v1657 = vld [vmem:[%s1654 + $0x10] sm:$0xff]
    %v1658 = vld [vmem:[%s1654 + $0x18] sm:$0xff]
    %s1659 = scalar_lea.vmem %s2, 3
    %v1660 = vld [vmem:[%s1659] sm:$0x1]
    %v1662 = vlaneseq
    %v1663 = vshrl.u32 %v1662, 7
    %v1664 = vsub.s32 0, %v1663
    %v1665 = vrot.slane %v1660, %v1664
    %1667 = vmatprep.subr.mxu0 0.0
    %1668 = vmatpush1.msra.mxu0 %v1655
    %1669 = vmatprep.subr.mxu0 0.0
    %1670 = vmatpush1.msra.mxu0 %v1656
    %1671 = vmatprep.subr.mxu0 0.0
    %1672 = vmatpush1.msra.mxu0 %v1657
    %1673 = vmatprep.subr.mxu0 0.0
    %1674 = vmatpush1.msra.mxu0 %v1658
    %1675 = vmatprep.subr.mxu0 0.0
    %1676 = vmatpush1.msra.mxu0 0.0
    %1677 = vmatprep.subr.mxu0 0.0
    %1678 = vmatpush1.msra.mxu0 0.0
    %1679 = vmatprep.subr.mxu0 0.0
    %1680 = vmatpush1.msra.mxu0 0.0
    %1681 = vmatprep.subr.mxu0 0.0
    %1682 = vmatpush1.msra.mxu0 0.0
    %1683 = vmatprep.subr.mxu0 0.0
    %1684 = vmatpush1.msra.mxu0 0.0
    %1685 = vmatprep.subr.mxu0 0.0
    %1686 = vmatpush1.msra.mxu0 0.0
    %1687 = vmatprep.subr.mxu0 0.0
    %1688 = vmatpush1.msra.mxu0 0.0
    %1689 = vmatprep.subr.mxu0 0.0
    %1690 = vmatpush1.msra.mxu0 0.0
    %1691 = vmatprep.subr.mxu0 0.0
    %1692 = vmatpush1.msra.mxu0 0.0
    %1693 = vmatprep.subr.mxu0 0.0
    %1694 = vmatpush1.msra.mxu0 0.0
    %1695 = vmatprep.subr.mxu0 0.0
    %1696 = vmatpush1.msra.mxu0 0.0
    %1697 = vmatprep.subr.mxu0 0.0
    %1698 = vmatpush1.msra.mxu0 0.0
    %1699 = vmatprep.subr.mxu0 0.0
    %1700 = vmatpush1.msra.mxu0 0.0
    %1701 = vmatprep.subr.mxu0 0.0
    %1702 = vmatpush1.msra.mxu0 0.0
    %1703 = vmatprep.subr.mxu0 0.0
    %1704 = vmatpush1.msra.mxu0 0.0
    %1705 = vmatprep.subr.mxu0 0.0
    %1706 = vmatpush1.msra.mxu0 0.0
    %1707 = vmatprep.subr.mxu0 0.0
    %1708 = vmatpush1.msra.mxu0 0.0
    %1709 = vmatprep.subr.mxu0 0.0
    %1710 = vmatpush1.msra.mxu0 0.0
    %1711 = vmatprep.subr.mxu0 0.0
    %1712 = vmatpush1.msra.mxu0 0.0
    %1713 = vmatprep.subr.mxu0 0.0
    %1714 = vmatpush1.msra.mxu0 0.0
    %1715 = vmatprep.subr.mxu0 0.0
    %1716 = vmatpush1.msra.mxu0 0.0
    %1717 = vmatprep.subr.mxu0 0.0
    %1718 = vmatpush1.msra.mxu0 0.0
    %1719 = vmatprep.subr.mxu0 0.0
    %1720 = vmatpush1.msra.mxu0 0.0
    %1721 = vmatprep.subr.mxu0 0.0
    %1722 = vmatpush1.msra.mxu0 0.0
    %1723 = vmatprep.subr.mxu0 0.0
    %1724 = vmatpush1.msra.mxu0 0.0
    %1725 = vmatprep.subr.mxu0 0.0
    %1726 = vmatpush1.msra.mxu0 0.0
    %1727 = vmatprep.subr.mxu0 0.0
    %1728 = vmatpush1.msra.mxu0 0.0
    %1729 = vmatprep.subr.mxu0 0.0
    %1730 = vmatpush1.msra.mxu0 0.0
    %1731 = vmatprep.mubr.f32.mxu0 0.0
    %1732 = vmatmul.mubr.f32.gmra.mrb[0].mxu0 %v48
    %v1733 = vpop.f32.mrb[0].mxu0
    %v1734 = vadd.f32 %v1665, %v1733
    %v1735 = vpop.f32.mrb[0].mxu0
    %1736 = vmatprep.mubr.f32.mxu0 0.0
    %1737 = vmatmul.mubr.f32.gmra.mrb[0].mxu0 %v51
    %v1738 = vpop.f32.mrb[0].mxu0
    %v1739 = vadd.f32 %v1665, %v1738
    %v1740 = vpop.f32.mrb[0].mxu0
    %1741 = vdwg.mxu0
    %s1742 = scalar_lea.vmem %s1, 224
    %v1743 = vld [vmem:[%s1742] sm:$0xff]
    %v1744 = vld [vmem:[%s1742 + $0x8] sm:$0xff]
    %v1745 = vld [vmem:[%s1742 + $0x10] sm:$0xff]
    %v1746 = vld [vmem:[%s1742 + $0x18] sm:$0xff]
    %s1747 = scalar_lea.vmem %s2, 7
    %v1748 = vld [vmem:[%s1747] sm:$0x1]
    %v1750 = vlaneseq
    %v1751 = vshrl.u32 %v1750, 7
    %v1752 = vsub.s32 0, %v1751
    %v1753 = vrot.slane %v1748, %v1752
    %1755 = vmatprep.subr.mxu0 0.0
    %1756 = vmatpush1.msra.mxu0 %v1743
    %1757 = vmatprep.subr.mxu0 0.0
    %1758 = vmatpush1.msra.mxu0 %v1744
    %1759 = vmatprep.subr.mxu0 0.0
    %1760 = vmatpush1.msra.mxu0 %v1745
    %1761 = vmatprep.subr.mxu0 0.0
    %1762 = vmatpush1.msra.mxu0 %v1746
    %1763 = vmatprep.subr.mxu0 0.0
    %1764 = vmatpush1.msra.mxu0 0.0
    %1765 = vmatprep.subr.mxu0 0.0
    %1766 = vmatpush1.msra.mxu0 0.0
    %1767 = vmatprep.subr.mxu0 0.0
    %1768 = vmatpush1.msra.mxu0 0.0
    %1769 = vmatprep.subr.mxu0 0.0
    %1770 = vmatpush1.msra.mxu0 0.0
    %1771 = vmatprep.subr.mxu0 0.0
    %1772 = vmatpush1.msra.mxu0 0.0
    %1773 = vmatprep.subr.mxu0 0.0
    %1774 = vmatpush1.msra.mxu0 0.0
    %1775 = vmatprep.subr.mxu0 0.0
    %1776 = vmatpush1.msra.mxu0 0.0
    %1777 = vmatprep.subr.mxu0 0.0
    %1778 = vmatpush1.msra.mxu0 0.0
    %1779 = vmatprep.subr.mxu0 0.0
    %1780 = vmatpush1.msra.mxu0 0.0
    %1781 = vmatprep.subr.mxu0 0.0
    %1782 = vmatpush1.msra.mxu0 0.0
    %1783 = vmatprep.subr.mxu0 0.0
    %1784 = vmatpush1.msra.mxu0 0.0
    %1785 = vmatprep.subr.mxu0 0.0
    %1786 = vmatpush1.msra.mxu0 0.0
    %1787 = vmatprep.subr.mxu0 0.0
    %1788 = vmatpush1.msra.mxu0 0.0
    %1789 = vmatprep.subr.mxu0 0.0
    %1790 = vmatpush1.msra.mxu0 0.0
    %1791 = vmatprep.subr.mxu0 0.0
    %1792 = vmatpush1.msra.mxu0 0.0
    %1793 = vmatprep.subr.mxu0 0.0
    %1794 = vmatpush1.msra.mxu0 0.0
    %1795 = vmatprep.subr.mxu0 0.0
    %1796 = vmatpush1.msra.mxu0 0.0
    %1797 = vmatprep.subr.mxu0 0.0
    %1798 = vmatpush1.msra.mxu0 0.0
    %1799 = vmatprep.subr.mxu0 0.0
    %1800 = vmatpush1.msra.mxu0 0.0
    %1801 = vmatprep.subr.mxu0 0.0
    %1802 = vmatpush1.msra.mxu0 0.0
    %1803 = vmatprep.subr.mxu0 0.0
    %1804 = vmatpush1.msra.mxu0 0.0
    %1805 = vmatprep.subr.mxu0 0.0
    %1806 = vmatpush1.msra.mxu0 0.0
    %1807 = vmatprep.subr.mxu0 0.0
    %1808 = vmatpush1.msra.mxu0 0.0
    %1809 = vmatprep.subr.mxu0 0.0
    %1810 = vmatpush1.msra.mxu0 0.0
    %1811 = vmatprep.subr.mxu0 0.0
    %1812 = vmatpush1.msra.mxu0 0.0
    %1813 = vmatprep.subr.mxu0 0.0
    %1814 = vmatpush1.msra.mxu0 0.0
    %1815 = vmatprep.subr.mxu0 0.0
    %1816 = vmatpush1.msra.mxu0 0.0
    %1817 = vmatprep.subr.mxu0 0.0
    %1818 = vmatpush1.msra.mxu0 0.0
    %1819 = vmatprep.mubr.f32.mxu0 0.0
    %1820 = vmatmul.mubr.f32.gmra.mrb[0].mxu0 %v48
    %v1821 = vpop.f32.mrb[0].mxu0
    %v1822 = vadd.f32 %v1753, %v1821
    %v1823 = vpop.f32.mrb[0].mxu0
    %1824 = vmatprep.mubr.f32.mxu0 0.0
    %1825 = vmatmul.mubr.f32.gmra.mrb[0].mxu0 %v51
    %v1826 = vpop.f32.mrb[0].mxu0
    %v1827 = vadd.f32 %v1753, %v1826
    %v1828 = vpop.f32.mrb[0].mxu0
    %1829 = vdwg.mxu0
    %s1830 = scalar_lea.vmem %s1, 352
    %v1831 = vld [vmem:[%s1830] sm:$0xff]
    %v1832 = vld [vmem:[%s1830 + $0x8] sm:$0xff]
    %v1833 = vld [vmem:[%s1830 + $0x10] sm:$0xff]
    %v1834 = vld [vmem:[%s1830 + $0x18] sm:$0xff]
    %s1835 = scalar_lea.vmem %s2, 11
    %v1836 = vld [vmem:[%s1835] sm:$0x1]
    %v1838 = vlaneseq
    %v1839 = vshrl.u32 %v1838, 7
    %v1840 = vsub.s32 0, %v1839
    %v1841 = vrot.slane %v1836, %v1840
    %1843 = vmatprep.subr.mxu0 0.0
    %1844 = vmatpush1.msra.mxu0 %v1831
    %1845 = vmatprep.subr.mxu0 0.0
    %1846 = vmatpush1.msra.mxu0 %v1832
    %1847 = vmatprep.subr.mxu0 0.0
    %1848 = vmatpush1.msra.mxu0 %v1833
    %1849 = vmatprep.subr.mxu0 0.0
    %1850 = vmatpush1.msra.mxu0 %v1834
    %1851 = vmatprep.subr.mxu0 0.0
    %1852 = vmatpush1.msra.mxu0 0.0
    %1853 = vmatprep.subr.mxu0 0.0
    %1854 = vmatpush1.msra.mxu0 0.0
    %1855 = vmatprep.subr.mxu0 0.0
    %1856 = vmatpush1.msra.mxu0 0.0
    %1857 = vmatprep.subr.mxu0 0.0
    %1858 = vmatpush1.msra.mxu0 0.0
    %1859 = vmatprep.subr.mxu0 0.0
    %1860 = vmatpush1.msra.mxu0 0.0
    %1861 = vmatprep.subr.mxu0 0.0
    %1862 = vmatpush1.msra.mxu0 0.0
    %1863 = vmatprep.subr.mxu0 0.0
    %1864 = vmatpush1.msra.mxu0 0.0
    %1865 = vmatprep.subr.mxu0 0.0
    %1866 = vmatpush1.msra.mxu0 0.0
    %1867 = vmatprep.subr.mxu0 0.0
    %1868 = vmatpush1.msra.mxu0 0.0
    %1869 = vmatprep.subr.mxu0 0.0
    %1870 = vmatpush1.msra.mxu0 0.0
    %1871 = vmatprep.subr.mxu0 0.0
    %1872 = vmatpush1.msra.mxu0 0.0
    %1873 = vmatprep.subr.mxu0 0.0
    %1874 = vmatpush1.msra.mxu0 0.0
    %1875 = vmatprep.subr.mxu0 0.0
    %1876 = vmatpush1.msra.mxu0 0.0
    %1877 = vmatprep.subr.mxu0 0.0
    %1878 = vmatpush1.msra.mxu0 0.0
    %1879 = vmatprep.subr.mxu0 0.0
    %1880 = vmatpush1.msra.mxu0 0.0
    %1881 = vmatprep.subr.mxu0 0.0
    %1882 = vmatpush1.msra.mxu0 0.0
    %1883 = vmatprep.subr.mxu0 0.0
    %1884 = vmatpush1.msra.mxu0 0.0
    %1885 = vmatprep.subr.mxu0 0.0
    %1886 = vmatpush1.msra.mxu0 0.0
    %1887 = vmatprep.subr.mxu0 0.0
    %1888 = vmatpush1.msra.mxu0 0.0
    %1889 = vmatprep.subr.mxu0 0.0
    %1890 = vmatpush1.msra.mxu0 0.0
    %1891 = vmatprep.subr.mxu0 0.0
    %1892 = vmatpush1.msra.mxu0 0.0
    %1893 = vmatprep.subr.mxu0 0.0
    %1894 = vmatpush1.msra.mxu0 0.0
    %1895 = vmatprep.subr.mxu0 0.0
    %1896 = vmatpush1.msra.mxu0 0.0
    %1897 = vmatprep.subr.mxu0 0.0
    %1898 = vmatpush1.msra.mxu0 0.0
    %1899 = vmatprep.subr.mxu0 0.0
    %1900 = vmatpush1.msra.mxu0 0.0
    %1901 = vmatprep.subr.mxu0 0.0
    %1902 = vmatpush1.msra.mxu0 0.0
    %1903 = vmatprep.subr.mxu0 0.0
    %1904 = vmatpush1.msra.mxu0 0.0
    %1905 = vmatprep.subr.mxu0 0.0
    %1906 = vmatpush1.msra.mxu0 0.0
    %1907 = vmatprep.mubr.f32.mxu0 0.0
    %1908 = vmatmul.mubr.f32.gmra.mrb[0].mxu0 %v48
    %v1909 = vpop.f32.mrb[0].mxu0
    %v1910 = vadd.f32 %v1841, %v1909
    %v1911 = vpop.f32.mrb[0].mxu0
    %1912 = vmatprep.mubr.f32.mxu0 0.0
    %1913 = vmatmul.mubr.f32.gmra.mrb[0].mxu0 %v51
    %v1914 = vpop.f32.mrb[0].mxu0
    %v1915 = vadd.f32 %v1841, %v1914
    %v1916 = vpop.f32.mrb[0].mxu0
    %1917 = vdwg.mxu0
    %v1919 = vsel %vm304, %v1734, 0
    %v1922 = vsel %vm304, %v1739, 0
    %v1925 = vsel %vm304, %v1822, 0
    %v1928 = vsel %vm304, %v1827, 0
    %1930 = vmatprep.subr.mxu0 0.0
    %1931 = vmatpush1.xpose.msra.mxu0 %v1925
    %1932 = vmatprep.subr.mxu0 0.0
    %1933 = vmatpush1.xpose.msra.mxu0 %v1928
    %1934 = vmatprep.subr.mxu0 0.0
    %1935 = vmatpush1.xpose.msra.mxu0 0.0
    %1936 = vmatprep.subr.mxu0 0.0
    %1937 = vmatpush1.xpose.msra.mxu0 0.0
    %1938 = vmatprep.subr.mxu0 0.0
    %1939 = vmatpush1.xpose.msra.mxu0 0.0
    %1940 = vmatprep.subr.mxu0 0.0
    %1941 = vmatpush1.xpose.msra.mxu0 0.0
    %1942 = vmatprep.subr.mxu0 0.0
    %1943 = vmatpush1.xpose.msra.mxu0 0.0
    %1944 = vmatprep.subr.mxu0 0.0
    %1945 = vmatpush1.xpose.msra.mxu0 0.0
    %1946 = vmatprep.subr.mxu0 0.0
    %1947 = vmatpush1.xpose.msra.mxu0 0.0
    %1948 = vmatprep.subr.mxu0 0.0
    %1949 = vmatpush1.xpose.msra.mxu0 0.0
    %1950 = vmatprep.subr.mxu0 0.0
    %1951 = vmatpush1.xpose.msra.mxu0 0.0
    %1952 = vmatprep.subr.mxu0 0.0
    %1953 = vmatpush1.xpose.msra.mxu0 0.0
    %1954 = vmatprep.subr.mxu0 0.0
    %1955 = vmatpush1.xpose.msra.mxu0 0.0
    %1956 = vmatprep.subr.mxu0 0.0
    %1957 = vmatpush1.xpose.msra.mxu0 0.0
    %1958 = vmatprep.subr.mxu0 0.0
    %1959 = vmatpush1.xpose.msra.mxu0 0.0
    %1960 = vmatprep.subr.mxu0 0.0
    %1961 = vmatpush1.xpose.msra.mxu0 0.0
    %1962 = vmatprep.subr.mxu0 0.0
    %1963 = vmatpush1.xpose.msra.mxu0 0.0
    %1964 = vmatprep.subr.mxu0 0.0
    %1965 = vmatpush1.xpose.msra.mxu0 0.0
    %1966 = vmatprep.subr.mxu0 0.0
    %1967 = vmatpush1.xpose.msra.mxu0 0.0
    %1968 = vmatprep.subr.mxu0 0.0
    %1969 = vmatpush1.xpose.msra.mxu0 0.0
    %1970 = vmatprep.subr.mxu0 0.0
    %1971 = vmatpush1.xpose.msra.mxu0 0.0
    %1972 = vmatprep.subr.mxu0 0.0
    %1973 = vmatpush1.xpose.msra.mxu0 0.0
    %1974 = vmatprep.subr.mxu0 0.0
    %1975 = vmatpush1.xpose.msra.mxu0 0.0
    %1976 = vmatprep.subr.mxu0 0.0
    %1977 = vmatpush1.xpose.msra.mxu0 0.0
    %1978 = vmatprep.subr.mxu0 0.0
    %1979 = vmatpush1.xpose.msra.mxu0 0.0
    %1980 = vmatprep.subr.mxu0 0.0
    %1981 = vmatpush1.xpose.msra.mxu0 0.0
    %1982 = vmatprep.subr.mxu0 0.0
    %1983 = vmatpush1.xpose.msra.mxu0 0.0
    %1984 = vmatprep.subr.mxu0 0.0
    %1985 = vmatpush1.xpose.msra.mxu0 0.0
    %1986 = vmatprep.subr.mxu0 0.0
    %1987 = vmatpush1.xpose.msra.mxu0 0.0
    %1988 = vmatprep.subr.mxu0 0.0
    %1989 = vmatpush1.xpose.msra.mxu0 0.0
    %1990 = vmatprep.subr.mxu0 0.0
    %1991 = vmatpush1.xpose.msra.mxu0 0.0
    %1992 = vmatprep.subr.mxu0 0.0
    %1993 = vmatpush1.xpose.msra.mxu0 0.0
    %1994 = vmatprep.mubr.f32.mxu0 0.0
    %1995 = vmatmul.mubr.f32.gmra.mrb[0].mxu0 %v1919
    %v1996 = vpop.f32.mrb[0].mxu0
    %v1997 = vadd.f32 %v33, %v1996
    %v1998 = vpop.f32.mrb[0].mxu0
    %1999 = vmatprep.mubr.f32.mxu0 0.0
    %2000 = vmatmul.mubr.f32.gmra.mrb[0].mxu0 %v1922
    %v2001 = vpop.f32.mrb[0].mxu0
    %v2002 = vadd.f32 %v34, %v2001
    %v2003 = vpop.f32.mrb[0].mxu0
    %2004 = vdwg.mxu0
    %v2005 = vsel %vm392, %v1997, -inf
    %2006 = vmax.xlane.f32.xlu0 %v2005
    %v2007 = vpop.xlane.xlu0 %2006
    %v2008 = vsel %vm392, %v2002, -inf
    %2009 = vmax.xlane.f32.xlu0 %v2008
    %v2010 = vpop.xlane.xlu0 %2009
    %v2011 = vsub.f32 %v1997, %v2007
    %v2012 = vsub.f32 %v2002, %v2010
    %v2013 = vmul.f32 %v2011, 1.442695
    %v2014 = vpow.pop %v2013
    %v2015 = vmul.f32 %v2012, 1.442695
    %v2016 = vpow.pop %v2015
    %v2017 = vsel %vm392, %v2014, 0.0
    %2018 = vadd.xlane.f32.xlu0 %v2017
    %v2019 = vpop.xlane.xlu0 %2018
    %v2020 = vsel %vm392, %v2016, 0.0
    %2021 = vadd.xlane.f32.xlu0 %v2020
    %v2022 = vpop.xlane.xlu0 %2021
    %v2023 = vrcp.pop %v2019
    %v2024 = vrcp.pop %v2022
    %v2026 = vsel %vm392, %v2014, 0
    %v2029 = vsel %vm392, %v2016, 0
    %2031 = vmatprep.subr.mxu0 0.0
    %2032 = vmatpush1.msra.mxu0 %v1910
    %2033 = vmatprep.subr.mxu0 0.0
    %2034 = vmatpush1.msra.mxu0 %v1915
    %2035 = vmatprep.subr.mxu0 0.0
    %2036 = vmatpush1.msra.mxu0 0.0
    %2037 = vmatprep.subr.mxu0 0.0
    %2038 = vmatpush1.msra.mxu0 0.0
    %2039 = vmatprep.subr.mxu0 0.0
    %2040 = vmatpush1.msra.mxu0 0.0
    %2041 = vmatprep.subr.mxu0 0.0
    %2042 = vmatpush1.msra.mxu0 0.0
    %2043 = vmatprep.subr.mxu0 0.0
    %2044 = vmatpush1.msra.mxu0 0.0
    %2045 = vmatprep.subr.mxu0 0.0
    %2046 = vmatpush1.msra.mxu0 0.0
    %2047 = vmatprep.subr.mxu0 0.0
    %2048 = vmatpush1.msra.mxu0 0.0
    %2049 = vmatprep.subr.mxu0 0.0
    %2050 = vmatpush1.msra.mxu0 0.0
    %2051 = vmatprep.subr.mxu0 0.0
    %2052 = vmatpush1.msra.mxu0 0.0
    %2053 = vmatprep.subr.mxu0 0.0
    %2054 = vmatpush1.msra.mxu0 0.0
    %2055 = vmatprep.subr.mxu0 0.0
    %2056 = vmatpush1.msra.mxu0 0.0
    %2057 = vmatprep.subr.mxu0 0.0
    %2058 = vmatpush1.msra.mxu0 0.0
    %2059 = vmatprep.subr.mxu0 0.0
    %2060 = vmatpush1.msra.mxu0 0.0
    %2061 = vmatprep.subr.mxu0 0.0
    %2062 = vmatpush1.msra.mxu0 0.0
    %2063 = vmatprep.subr.mxu0 0.0
    %2064 = vmatpush1.msra.mxu0 0.0
    %2065 = vmatprep.subr.mxu0 0.0
    %2066 = vmatpush1.msra.mxu0 0.0
    %2067 = vmatprep.subr.mxu0 0.0
    %2068 = vmatpush1.msra.mxu0 0.0
    %2069 = vmatprep.subr.mxu0 0.0
    %2070 = vmatpush1.msra.mxu0 0.0
    %2071 = vmatprep.subr.mxu0 0.0
    %2072 = vmatpush1.msra.mxu0 0.0
    %2073 = vmatprep.subr.mxu0 0.0
    %2074 = vmatpush1.msra.mxu0 0.0
    %2075 = vmatprep.subr.mxu0 0.0
    %2076 = vmatpush1.msra.mxu0 0.0
    %2077 = vmatprep.subr.mxu0 0.0
    %2078 = vmatpush1.msra.mxu0 0.0
    %2079 = vmatprep.subr.mxu0 0.0
    %2080 = vmatpush1.msra.mxu0 0.0
    %2081 = vmatprep.subr.mxu0 0.0
    %2082 = vmatpush1.msra.mxu0 0.0
    %2083 = vmatprep.subr.mxu0 0.0
    %2084 = vmatpush1.msra.mxu0 0.0
    %2085 = vmatprep.subr.mxu0 0.0
    %2086 = vmatpush1.msra.mxu0 0.0
    %2087 = vmatprep.subr.mxu0 0.0
    %2088 = vmatpush1.msra.mxu0 0.0
    %2089 = vmatprep.subr.mxu0 0.0
    %2090 = vmatpush1.msra.mxu0 0.0
    %2091 = vmatprep.subr.mxu0 0.0
    %2092 = vmatpush1.msra.mxu0 0.0
    %2093 = vmatprep.subr.mxu0 0.0
    %2094 = vmatpush1.msra.mxu0 0.0
    %2095 = vmatprep.mubr.f32.mxu0 0.0
    %2096 = vmatmul.mubr.f32.gmra.mrb[0].mxu0 %v2026
    %v2097 = vpop.f32.mrb[0].mxu0
    %v2098 = vadd.f32 0.0, %v2097
    %v2099 = vpop.f32.mrb[0].mxu0
    %2100 = vmatprep.mubr.f32.mxu0 0.0
    %2101 = vmatmul.mubr.f32.gmra.mrb[0].mxu0 %v2029
    %v2102 = vpop.f32.mrb[0].mxu0
    %v2103 = vadd.f32 0.0, %v2102
    %v2104 = vpop.f32.mrb[0].mxu0
    %2105 = vdwg.mxu0
    %v2106 = vmul.f32 %v2098, %v2023
    %v2107 = vmul.f32 %v2103, %v2024
    %s2108 = scalar_lea.vmem %s3, 24
    %v2109 = vld [vmem:[%s2108] sm:$0xff]
    %v2111 = vsel %vm304, %v2106, 0
    %v2114 = vsel %vm304, %v2107, 0
    %2116 = vmatprep.subr.mxu0 0.0
    %2117 = vmatpush1.msra.mxu0 %v2109
    %2118 = vmatprep.subr.mxu0 0.0
    %2119 = vmatpush1.msra.mxu0 0.0
    %2120 = vmatprep.subr.mxu0 0.0
    %2121 = vmatpush1.msra.mxu0 0.0
    %2122 = vmatprep.subr.mxu0 0.0
    %2123 = vmatpush1.msra.mxu0 0.0
    %2124 = vmatprep.subr.mxu0 0.0
    %2125 = vmatpush1.msra.mxu0 0.0
    %2126 = vmatprep.subr.mxu0 0.0
    %2127 = vmatpush1.msra.mxu0 0.0
    %2128 = vmatprep.subr.mxu0 0.0
    %2129 = vmatpush1.msra.mxu0 0.0
    %2130 = vmatprep.subr.mxu0 0.0
    %2131 = vmatpush1.msra.mxu0 0.0
    %2132 = vmatprep.subr.mxu0 0.0
    %2133 = vmatpush1.msra.mxu0 0.0
    %2134 = vmatprep.subr.mxu0 0.0
    %2135 = vmatpush1.msra.mxu0 0.0
    %2136 = vmatprep.subr.mxu0 0.0
    %2137 = vmatpush1.msra.mxu0 0.0
    %2138 = vmatprep.subr.mxu0 0.0
    %2139 = vmatpush1.msra.mxu0 0.0
    %2140 = vmatprep.subr.mxu0 0.0
    %2141 = vmatpush1.msra.mxu0 0.0
    %2142 = vmatprep.subr.mxu0 0.0
    %2143 = vmatpush1.msra.mxu0 0.0
    %2144 = vmatprep.subr.mxu0 0.0
    %2145 = vmatpush1.msra.mxu0 0.0
    %2146 = vmatprep.subr.mxu0 0.0
    %2147 = vmatpush1.msra.mxu0 0.0
    %2148 = vmatprep.subr.mxu0 0.0
    %2149 = vmatpush1.msra.mxu0 0.0
    %2150 = vmatprep.subr.mxu0 0.0
    %2151 = vmatpush1.msra.mxu0 0.0
    %2152 = vmatprep.subr.mxu0 0.0
    %2153 = vmatpush1.msra.mxu0 0.0
    %2154 = vmatprep.subr.mxu0 0.0
    %2155 = vmatpush1.msra.mxu0 0.0
    %2156 = vmatprep.subr.mxu0 0.0
    %2157 = vmatpush1.msra.mxu0 0.0
    %2158 = vmatprep.subr.mxu0 0.0
    %2159 = vmatpush1.msra.mxu0 0.0
    %2160 = vmatprep.subr.mxu0 0.0
    %2161 = vmatpush1.msra.mxu0 0.0
    %2162 = vmatprep.subr.mxu0 0.0
    %2163 = vmatpush1.msra.mxu0 0.0
    %2164 = vmatprep.subr.mxu0 0.0
    %2165 = vmatpush1.msra.mxu0 0.0
    %2166 = vmatprep.subr.mxu0 0.0
    %2167 = vmatpush1.msra.mxu0 0.0
    %2168 = vmatprep.subr.mxu0 0.0
    %2169 = vmatpush1.msra.mxu0 0.0
    %2170 = vmatprep.subr.mxu0 0.0
    %2171 = vmatpush1.msra.mxu0 0.0
    %2172 = vmatprep.subr.mxu0 0.0
    %2173 = vmatpush1.msra.mxu0 0.0
    %2174 = vmatprep.subr.mxu0 0.0
    %2175 = vmatpush1.msra.mxu0 0.0
    %2176 = vmatprep.subr.mxu0 0.0
    %2177 = vmatpush1.msra.mxu0 0.0
    %2178 = vmatprep.subr.mxu0 0.0
    %2179 = vmatpush1.msra.mxu0 0.0
    %2180 = vmatprep.mubr.f32.mxu0 0.0
    %2181 = vmatmul.mubr.f32.gmra.mrb[0].mxu0 %v2111
    %v2182 = vpop.f32.mrb[0].mxu0
    %v2183 = vadd.f32 0.0, %v2182
    %v2184 = vpop.f32.mrb[0].mxu0
    %2185 = vmatprep.mubr.f32.mxu0 0.0
    %2186 = vmatmul.mubr.f32.gmra.mrb[0].mxu0 %v2114
    %v2187 = vpop.f32.mrb[0].mxu0
    %v2188 = vadd.f32 0.0, %v2187
    %v2189 = vpop.f32.mrb[0].mxu0
    %2190 = vdwg.mxu0
    %v2191 = vadd.f32 %v1652, %v2183
    %v2192 = vadd.f32 %v1653, %v2188
    %v2193 = vld [vmem:[%s4] sm:$0x1]
    %v2195 = vlaneseq
    %v2196 = vshrl.u32 %v2195, 7
    %v2197 = vsub.s32 0, %v2196
    %v2198 = vrot.slane %v2193, %v2197
    %v2200 = vadd.f32 %v2191, %v2198
    %v2201 = vadd.f32 %v2192, %v2198
    %2202 = vst.msk [vmem:[#allocation2] sm:$0xff] %vm46, %v2200
    %2203 = vst.msk [vmem:[#allocation2 + $0x8] sm:$0xff] %vm46, %v2201
    // Predicated region
    $region22: #{self_attention.1} parent=1 // pred_check
      _
    $region23: #{self_attention.1} parent=1 // pred_check_branch
      %2205 = sbr.rel (0) target = $region25
    $region24: #{self_attention.1} parent=1 // pred_region
      %s2207 = ssub.s32 256, 256
      %2208 = vsyncadd [#allocation3], %s2207
      %s2209 = sshll.u32 [#allocation2], 4
      %s2210 = int_to_ptr.vmem [resolvable:$true] %s2209
      %2215 = dma.vmem_to_hbm [thread:$0]  %s2210, 256, %s5, [#allocation3], 128, 128, 8
    $region25: #{self_attention.1} parent=1 // pred_fallthru
      _
    // Predicated region
    $region26: #{self_attention.1} parent=1 // pred_check
      _
    $region27: #{self_attention.1} parent=1 // pred_check_branch
      %2217 = sbr.rel (0) target = $region29
    $region28: #{self_attention.1} parent=1 // pred_region
      %2218 = dma.done [#allocation3], 256
    $region29: #{self_attention.1} parent=1 // pred_fallthru
      _
    %2219 = vsyncpa [#allocation3], 1

</llo_original>
